<compile_context>
chip_gen: v7x
topology: tpu7x:2x2x1
jax: 0.10.0
libtpu: 0.0.40
codegen_flags: <defaults>
</compile_context>

<pallas_src>
import jax
import jax.numpy as jnp
from jax.experimental import pallas as pl
from jax.experimental.pallas import tpu as pltpu


def _make_conv_relu_stats_kernel(Hp, Wp, Ho, Wo, Cin, Cout, KH, KW):
    R = Ho * Wo  # conv-output pixels per image, rows ordered (h, w)

    def kernel(xp_ref, w_ref, b_ref, y_ref, stats_ref, patch_ref):
        # ---- im2col: write each (R, Cin) tap into its static lane slot of the bf16
        # staging buffer so the conv becomes ONE MXU matmul with K = KH*KW*Cin.
        # The window gather is done from the f32 input (robust packed-layout slicing);
        # the MXU still consumes bf16 operands via the staging buffer.
        for kh in range(KH):
            for kw in range(KW):
                c0 = (kh * KW + kw) * Cin
                tap = xp_ref[0, kh:kh + Ho, kw:kw + Wo, :].reshape(R, Cin)
                patch_ref[:, c0:c0 + Cin] = tap.astype(jnp.bfloat16)

        # ---- single bf16 MXU matmul, f32 accumulation ----
        y = jnp.dot(patch_ref[...], w_ref[...], preferred_element_type=jnp.float32)
        # ---- fused bias + ReLU ----
        y = jnp.maximum(y + b_ref[...], 0.0)                        # (R, Cout) f32
        y_ref[0] = y
        # ---- per-image partial BatchNorm sums (reduced over the batch in the wrapper,
        #      keeping the accumulation in f32 per tile) ----
        stats_ref[0, 0:1, :] = jnp.sum(y, axis=0, keepdims=True)
        stats_ref[0, 1:2, :] = jnp.sum(y * y, axis=0, keepdims=True)

    return kernel


def _make_norm_pool_kernel(Ho, Wo, Cout):
    Ho2, Wo2 = Ho // 2, Wo // 2

    def kernel(y_ref, scale_ref, shift_ref, out_ref):
        # BatchNorm as one fused multiply-add with precomputed per-channel scale/shift.
        yn = y_ref[0] * scale_ref[...] + shift_ref[...]             # (Ho*Wo, Cout)
        # 2x2 max-pool fully in registers: pair rows (H), then pair columns (W).
        y4 = yn.reshape(Ho2, 2, Wo, Cout)
        yh = jnp.maximum(y4[:, 0, :, :], y4[:, 1, :, :])            # (Ho2, Wo, Cout)
        y5 = yh.reshape(Ho2, Wo2, 2, Cout)
        out_ref[0] = jnp.maximum(y5[:, :, 0, :], y5[:, :, 1, :])    # (Ho2, Wo2, Cout)

    return kernel


def cnn_block_forward(x_nchw, w_oihw, b, gamma, beta, eps=1e-5):
    """Forward of CNNBlock with maxpool_kernel=(2,2). Input/weights in PyTorch layout."""
    N, Cin, H, W = x_nchw.shape
    Cout, Cin2, KH, KW = w_oihw.shape
    assert Cin == Cin2
    pad = KH // 2                                    # PyTorch: padding=int(conv_kernel[0]/2)

    # Boundary glue: NCHW -> NHWC + spatial zero-pad.
    x = jnp.transpose(x_nchw, (0, 2, 3, 1)).astype(jnp.float32)
    xp = jnp.pad(x, ((0, 0), (pad, pad), (pad, pad), (0, 0)))
    Hp, Wp = H + 2 * pad, W + 2 * pad
    Ho, Wo = Hp - KH + 1, Wp - KW + 1
    assert Ho % 2 == 0 and Wo % 2 == 0               # MaxPool2d((2,2)) on even spatial dims
    Ho2, Wo2 = Ho // 2, Wo // 2
    R = Ho * Wo
    K = KH * KW * Cin

    # Weights in im2col order (kh, kw, cin) x cout; bf16 for the MXU.
    w2 = jnp.transpose(w_oihw, (2, 3, 1, 0)).reshape(K, Cout).astype(jnp.bfloat16)
    b2 = b.reshape(1, Cout).astype(jnp.float32)

    # ---- Pass 1: conv + ReLU + per-image BN partial sums (grid over batch) ----
    conv_kernel = _make_conv_relu_stats_kernel(Hp, Wp, Ho, Wo, Cin, Cout, KH, KW)
    y, stats = pl.pallas_call(
        conv_kernel,
        out_shape=(jax.ShapeDtypeStruct((N, R, Cout), jnp.float32),
                   jax.ShapeDtypeStruct((N, 2, Cout), jnp.float32)),
        grid_spec=pltpu.PrefetchScalarGridSpec(
            num_scalar_prefetch=0,
            grid=(N,),
            in_specs=[
                pl.BlockSpec((1, Hp, Wp, Cin), lambda n: (n, 0, 0, 0)),   # padded image n
                pl.BlockSpec((K, Cout), lambda n: (0, 0)),                 # im2col weights
                pl.BlockSpec((1, Cout), lambda n: (0, 0)),                 # bias
            ],
            out_specs=(
                pl.BlockSpec((1, R, Cout), lambda n: (n, 0, 0)),           # conv+ReLU out
                pl.BlockSpec((1, 2, Cout), lambda n: (n, 0, 0)),           # [sum, sumsq]
            ),
            scratch_shapes=[pltpu.VMEM((R, K), jnp.bfloat16)],             # im2col staging
        ),
        compiler_params=pltpu.CompilerParams(dimension_semantics=("parallel",)),
    )(xp, w2, b2)

    # ---- BatchNorm affine from f32 partial sums (tiny per-channel math, plain XLA) ----
    total = jnp.sum(stats, axis=0)                                   # (2, Cout)
    count = N * R
    mean = total[0] / count
    var = jnp.maximum(total[1] / count - mean * mean, 0.0)           # biased (train) variance
    scale = gamma.astype(jnp.float32) * jax.lax.rsqrt(var + eps)
    shift = beta.astype(jnp.float32) - mean * scale
    scale2 = scale.reshape(1, Cout)
    shift2 = shift.reshape(1, Cout)

    # ---- Pass 2: normalize + 2x2 max-pool (grid over batch, all in-register) ----
    pool_kernel = _make_norm_pool_kernel(Ho, Wo, Cout)
    out_nhwc = pl.pallas_call(
        pool_kernel,
        out_shape=jax.ShapeDtypeStruct((N, Ho2, Wo2, Cout), jnp.float32),
        grid_spec=pltpu.PrefetchScalarGridSpec(
            num_scalar_prefetch=0,
            grid=(N,),
            in_specs=[
                pl.BlockSpec((1, R, Cout), lambda n: (n, 0, 0)),
                pl.BlockSpec((1, Cout), lambda n: (0, 0)),
                pl.BlockSpec((1, Cout), lambda n: (0, 0)),
            ],
            out_specs=pl.BlockSpec((1, Ho2, Wo2, Cout), lambda n: (n, 0, 0, 0)),
        ),
        compiler_params=pltpu.CompilerParams(dimension_semantics=("parallel",)),
    )(y, scale2, shift2)

    return jnp.transpose(out_nhwc, (0, 3, 1, 2))     # back to NCHW for the PyTorch spec


def _reference(x, w, b, gamma, beta, eps=1e-5):
    """Pure-JAX reference matching PyTorch train-mode forward."""
    pad = w.shape[2] // 2
    y = jax.lax.conv_general_dilated(
        x, w, window_strides=(1, 1), padding=[(pad, pad), (pad, pad)],
        dimension_numbers=("NCHW", "OIHW", "NCHW"))
    y = y + b[None, :, None, None]
    y = jnp.maximum(y, 0.0)
    mean = jnp.mean(y, axis=(0, 2, 3), keepdims=True)
    var = jnp.mean((y - mean) ** 2, axis=(0, 2, 3), keepdims=True)
    y = (y - mean) / jnp.sqrt(var + eps)
    y = y * gamma[None, :, None, None] + beta[None, :, None, None]
    return jax.lax.reduce_window(y, -jnp.inf, jax.lax.max,
                                 (1, 1, 2, 2), (1, 1, 2, 2), "VALID")


if __name__ == "__main__":
    key = jax.random.PRNGKey(0)
    k_x, k_w, k_b, k_g, k_be = jax.random.split(key, 5)

    # Small shapes consistent with the module: CNNBlock(in_chan=4, out_chan=8, (3,3))
    N, Cin, H, W = 2, 4, 16, 16
    Cout, KH, KW = 8, 3, 3

    x = jax.random.normal(k_x, (N, Cin, H, W), jnp.float32)
    w = 0.1 * jax.random.normal(k_w, (Cout, Cin, KH, KW), jnp.float32)
    b = 0.1 * jax.random.normal(k_b, (Cout,), jnp.float32)
    gamma = 1.0 + 0.1 * jax.random.normal(k_g, (Cout,), jnp.float32)
    beta = 0.1 * jax.random.normal(k_be, (Cout,), jnp.float32)

    out = jax.jit(cnn_block_forward)(x, w, b, gamma, beta)
    out = jax.block_until_ready(out)

    ref = _reference(x, w, b, gamma, beta)
    assert out.shape == ref.shape == (N, Cout, H // 2, W // 2), (out.shape, ref.shape)
    max_err = float(jnp.max(jnp.abs(out - ref)))
    assert jnp.allclose(out, ref, rtol=2e-2, atol=2e-2), f"max abs err = {max_err}"

    print("KERNEL_OK")
</pallas_src>

<mosaic_0001>
module attributes {stable_mosaic.version = 11 : i64} {
  func.func @kernel(%arg0: i32, %arg1: memref<1x18x18x4xf32, #tpu.memory_space<vmem>>, %arg2: memref<36x8xbf16, #tpu.memory_space<vmem>>, %arg3: memref<1x8xf32, #tpu.memory_space<vmem>>, %arg4: memref<1x256x8xf32, #tpu.memory_space<vmem>>, %arg5: memref<1x2x8xf32, #tpu.memory_space<vmem>>, %arg6: memref<256x36xbf16, #tpu.memory_space<vmem>>) attributes {dimension_semantics = [#tpu.dimension_semantics<parallel>], iteration_bounds = array<i64: 2>, scalar_prefetch = 0 : i64, scratch_operands = 1 : i64, tpu.core_type = #tpu.core_type<tc>, window_params = [{transform_indices = @transform_0, window_bounds = array<i64: 1, 18, 18, 4>}, {pipeline_mode = #tpu.pipeline_mode<synchronous>, transform_indices = @transform_1, window_bounds = array<i64: 36, 8>}, {pipeline_mode = #tpu.pipeline_mode<synchronous>, transform_indices = @transform_2, window_bounds = array<i64: 1, 8>}, {transform_indices = @transform_3, window_bounds = array<i64: 1, 256, 8>}, {transform_indices = @transform_4, window_bounds = array<i64: 1, 2, 8>}]} {
    %c0 = arith.constant 0 : index
    %c0_0 = arith.constant 0 : index
    %c0_1 = arith.constant 0 : index
    %c0_2 = arith.constant 0 : index
    %0 = vector.load %arg1[%c0, %c0_0, %c0_1, %c0_2] : memref<1x18x18x4xf32, #tpu.memory_space<vmem>>, vector<1x16x16x4xf32>
    %1 = vector.shape_cast %0 : vector<1x16x16x4xf32> to vector<16x16x4xf32>
    %2 = vector.shape_cast %1 : vector<16x16x4xf32> to vector<256x4xf32>
    %3 = arith.truncf %2 : vector<256x4xf32> to vector<256x4xbf16>
    %c0_3 = arith.constant 0 : index
    %c0_4 = arith.constant 0 : index
    %4 = vector.load %arg6[%c0_3, %c0_4] : memref<256x36xbf16, #tpu.memory_space<vmem>>, vector<256x4xbf16>
    tpu.vector_store %arg6[%c0_3, %c0_4], %3 {strides = array<i32>} : memref<256x36xbf16, #tpu.memory_space<vmem>>, vector<256x4xbf16>,
    %c0_5 = arith.constant 0 : index
    %c0_6 = arith.constant 0 : index
    %c1 = arith.constant 1 : index
    %c0_7 = arith.constant 0 : index
    %5 = vector.load %arg1[%c0_5, %c0_6, %c1, %c0_7] : memref<1x18x18x4xf32, #tpu.memory_space<vmem>>, vector<1x16x16x4xf32>
    %6 = vector.shape_cast %5 : vector<1x16x16x4xf32> to vector<16x16x4xf32>
    %7 = vector.shape_cast %6 : vector<16x16x4xf32> to vector<256x4xf32>
    %8 = arith.truncf %7 : vector<256x4xf32> to vector<256x4xbf16>
    %c0_8 = arith.constant 0 : index
    %c4 = arith.constant 4 : index
    %9 = vector.load %arg6[%c0_8, %c4] : memref<256x36xbf16, #tpu.memory_space<vmem>>, vector<256x4xbf16>
    tpu.vector_store %arg6[%c0_8, %c4], %8 {strides = array<i32>} : memref<256x36xbf16, #tpu.memory_space<vmem>>, vector<256x4xbf16>,
    %c0_9 = arith.constant 0 : index
    %c0_10 = arith.constant 0 : index
    %c2 = arith.constant 2 : index
    %c0_11 = arith.constant 0 : index
    %10 = vector.load %arg1[%c0_9, %c0_10, %c2, %c0_11] : memref<1x18x18x4xf32, #tpu.memory_space<vmem>>, vector<1x16x16x4xf32>
    %11 = vector.shape_cast %10 : vector<1x16x16x4xf32> to vector<16x16x4xf32>
    %12 = vector.shape_cast %11 : vector<16x16x4xf32> to vector<256x4xf32>
    %13 = arith.truncf %12 : vector<256x4xf32> to vector<256x4xbf16>
    %c0_12 = arith.constant 0 : index
    %c8 = arith.constant 8 : index
    %14 = vector.load %arg6[%c0_12, %c8] : memref<256x36xbf16, #tpu.memory_space<vmem>>, vector<256x4xbf16>
    tpu.vector_store %arg6[%c0_12, %c8], %13 {strides = array<i32>} : memref<256x36xbf16, #tpu.memory_space<vmem>>, vector<256x4xbf16>,
    %c0_13 = arith.constant 0 : index
    %c1_14 = arith.constant 1 : index
    %c0_15 = arith.constant 0 : index
    %c0_16 = arith.constant 0 : index
    %15 = vector.load %arg1[%c0_13, %c1_14, %c0_15, %c0_16] : memref<1x18x18x4xf32, #tpu.memory_space<vmem>>, vector<1x16x16x4xf32>
    %16 = vector.shape_cast %15 : vector<1x16x16x4xf32> to vector<16x16x4xf32>
    %17 = vector.shape_cast %16 : vector<16x16x4xf32> to vector<256x4xf32>
    %18 = arith.truncf %17 : vector<256x4xf32> to vector<256x4xbf16>
    %c0_17 = arith.constant 0 : index
    %c12 = arith.constant 12 : index
    %19 = vector.load %arg6[%c0_17, %c12] : memref<256x36xbf16, #tpu.memory_space<vmem>>, vector<256x4xbf16>
    tpu.vector_store %arg6[%c0_17, %c12], %18 {strides = array<i32>} : memref<256x36xbf16, #tpu.memory_space<vmem>>, vector<256x4xbf16>,
    %c0_18 = arith.constant 0 : index
    %c1_19 = arith.constant 1 : index
    %c1_20 = arith.constant 1 : index
    %c0_21 = arith.constant 0 : index
    %20 = vector.load %arg1[%c0_18, %c1_19, %c1_20, %c0_21] : memref<1x18x18x4xf32, #tpu.memory_space<vmem>>, vector<1x16x16x4xf32>
    %21 = vector.shape_cast %20 : vector<1x16x16x4xf32> to vector<16x16x4xf32>
    %22 = vector.shape_cast %21 : vector<16x16x4xf32> to vector<256x4xf32>
    %23 = arith.truncf %22 : vector<256x4xf32> to vector<256x4xbf16>
    %c0_22 = arith.constant 0 : index
    %c16 = arith.constant 16 : index
    %24 = vector.load %arg6[%c0_22, %c16] : memref<256x36xbf16, #tpu.memory_space<vmem>>, vector<256x4xbf16>
    tpu.vector_store %arg6[%c0_22, %c16], %23 {strides = array<i32>} : memref<256x36xbf16, #tpu.memory_space<vmem>>, vector<256x4xbf16>,
    %c0_23 = arith.constant 0 : index
    %c1_24 = arith.constant 1 : index
    %c2_25 = arith.constant 2 : index
    %c0_26 = arith.constant 0 : index
    %25 = vector.load %arg1[%c0_23, %c1_24, %c2_25, %c0_26] : memref<1x18x18x4xf32, #tpu.memory_space<vmem>>, vector<1x16x16x4xf32>
    %26 = vector.shape_cast %25 : vector<1x16x16x4xf32> to vector<16x16x4xf32>
    %27 = vector.shape_cast %26 : vector<16x16x4xf32> to vector<256x4xf32>
    %28 = arith.truncf %27 : vector<256x4xf32> to vector<256x4xbf16>
    %c0_27 = arith.constant 0 : index
    %c20 = arith.constant 20 : index
    %29 = vector.load %arg6[%c0_27, %c20] : memref<256x36xbf16, #tpu.memory_space<vmem>>, vector<256x4xbf16>
    tpu.vector_store %arg6[%c0_27, %c20], %28 {strides = array<i32>} : memref<256x36xbf16, #tpu.memory_space<vmem>>, vector<256x4xbf16>,
    %c0_28 = arith.constant 0 : index
    %c2_29 = arith.constant 2 : index
    %c0_30 = arith.constant 0 : index
    %c0_31 = arith.constant 0 : index
    %30 = vector.load %arg1[%c0_28, %c2_29, %c0_30, %c0_31] : memref<1x18x18x4xf32, #tpu.memory_space<vmem>>, vector<1x16x16x4xf32>
    %31 = vector.shape_cast %30 : vector<1x16x16x4xf32> to vector<16x16x4xf32>
    %32 = vector.shape_cast %31 : vector<16x16x4xf32> to vector<256x4xf32>
    %33 = arith.truncf %32 : vector<256x4xf32> to vector<256x4xbf16>
    %c0_32 = arith.constant 0 : index
    %c24 = arith.constant 24 : index
    %34 = vector.load %arg6[%c0_32, %c24] : memref<256x36xbf16, #tpu.memory_space<vmem>>, vector<256x4xbf16>
    tpu.vector_store %arg6[%c0_32, %c24], %33 {strides = array<i32>} : memref<256x36xbf16, #tpu.memory_space<vmem>>, vector<256x4xbf16>,
    %c0_33 = arith.constant 0 : index
    %c2_34 = arith.constant 2 : index
    %c1_35 = arith.constant 1 : index
    %c0_36 = arith.constant 0 : index
    %35 = vector.load %arg1[%c0_33, %c2_34, %c1_35, %c0_36] : memref<1x18x18x4xf32, #tpu.memory_space<vmem>>, vector<1x16x16x4xf32>
    %36 = vector.shape_cast %35 : vector<1x16x16x4xf32> to vector<16x16x4xf32>
    %37 = vector.shape_cast %36 : vector<16x16x4xf32> to vector<256x4xf32>
    %38 = arith.truncf %37 : vector<256x4xf32> to vector<256x4xbf16>
    %c0_37 = arith.constant 0 : index
    %c28 = arith.constant 28 : index
    %39 = vector.load %arg6[%c0_37, %c28] : memref<256x36xbf16, #tpu.memory_space<vmem>>, vector<256x4xbf16>
    tpu.vector_store %arg6[%c0_37, %c28], %38 {strides = array<i32>} : memref<256x36xbf16, #tpu.memory_space<vmem>>, vector<256x4xbf16>,
    %c0_38 = arith.constant 0 : index
    %c2_39 = arith.constant 2 : index
    %c2_40 = arith.constant 2 : index
    %c0_41 = arith.constant 0 : index
    %40 = vector.load %arg1[%c0_38, %c2_39, %c2_40, %c0_41] : memref<1x18x18x4xf32, #tpu.memory_space<vmem>>, vector<1x16x16x4xf32>
    %41 = vector.shape_cast %40 : vector<1x16x16x4xf32> to vector<16x16x4xf32>
    %42 = vector.shape_cast %41 : vector<16x16x4xf32> to vector<256x4xf32>
    %43 = arith.truncf %42 : vector<256x4xf32> to vector<256x4xbf16>
    %c0_42 = arith.constant 0 : index
    %c32 = arith.constant 32 : index
    %44 = vector.load %arg6[%c0_42, %c32] : memref<256x36xbf16, #tpu.memory_space<vmem>>, vector<256x4xbf16>
    tpu.vector_store %arg6[%c0_42, %c32], %43 {strides = array<i32>} : memref<256x36xbf16, #tpu.memory_space<vmem>>, vector<256x4xbf16>,
    %c0_43 = arith.constant 0 : index
    %c0_44 = arith.constant 0 : index
    %45 = vector.load %arg6[%c0_43, %c0_44] : memref<256x36xbf16, #tpu.memory_space<vmem>>, vector<256x36xbf16>
    %c0_45 = arith.constant 0 : index
    %c0_46 = arith.constant 0 : index
    %46 = vector.load %arg2[%c0_45, %c0_46] : memref<36x8xbf16, #tpu.memory_space<vmem>>, vector<36x8xbf16>
    %cst = arith.constant dense<0.000000e+00> : vector<256x8xf32>
    %47 = tpu.matmul %45, %46, %cst {dimension_numbers = #tpu.dot_dimension_numbers<[1], [0], [0], [1], [0, 0, 1, 1], [], []>} : vector<256x36xbf16>, vector<36x8xbf16>, vector<256x8xf32> -> vector<256x8xf32>
    %c0_47 = arith.constant 0 : index
    %c0_48 = arith.constant 0 : index
    %48 = vector.load %arg3[%c0_47, %c0_48] : memref<1x8xf32, #tpu.memory_space<vmem>>, vector<1x8xf32>
    %49 = vector.broadcast %48 : vector<1x8xf32> to vector<256x8xf32>
    %50 = arith.addf %47, %49 : vector<256x8xf32>
    %cst_49 = arith.constant 0.000000e+00 : f32
    %51 = vector.broadcast %cst_49 : f32 to vector<256x8xf32>
    %52 = arith.maximumf %50, %51 : vector<256x8xf32>
    %c0_50 = arith.constant 0 : index
    %c0_51 = arith.constant 0 : index
    %c0_52 = arith.constant 0 : index
    %53 = vector.load %arg4[%c0_50, %c0_51, %c0_52] : memref<1x256x8xf32, #tpu.memory_space<vmem>>, vector<1x256x8xf32>
    %54 = vector.shape_cast %53 : vector<1x256x8xf32> to vector<256x8xf32>
    %55 = vector.shape_cast %52 : vector<256x8xf32> to vector<1x256x8xf32>
    tpu.vector_store %arg4[%c0_50, %c0_51, %c0_52], %55 {strides = array<i32>} : memref<1x256x8xf32, #tpu.memory_space<vmem>>, vector<1x256x8xf32>,
    %cst_53 = arith.constant dense<0.000000e+00> : vector<8xf32>
    %56 = vector.multi_reduction <add>, %52, %cst_53 [0] : vector<256x8xf32> to vector<8xf32>
    %57 = vector.shape_cast %56 : vector<8xf32> to vector<1x8xf32>
    %c0_54 = arith.constant 0 : index
    %c0_55 = arith.constant 0 : index
    %c0_56 = arith.constant 0 : index
    %58 = vector.load %arg5[%c0_54, %c0_55, %c0_56] : memref<1x2x8xf32, #tpu.memory_space<vmem>>, vector<1x1x8xf32>
    %59 = vector.shape_cast %58 : vector<1x1x8xf32> to vector<1x8xf32>
    %60 = vector.shape_cast %57 : vector<1x8xf32> to vector<1x1x8xf32>
    tpu.vector_store %arg5[%c0_54, %c0_55, %c0_56], %60 {strides = array<i32>} : memref<1x2x8xf32, #tpu.memory_space<vmem>>, vector<1x1x8xf32>,
    %61 = arith.mulf %52, %52 : vector<256x8xf32>
    %cst_57 = arith.constant dense<0.000000e+00> : vector<8xf32>
    %62 = vector.multi_reduction <add>, %61, %cst_57 [0] : vector<256x8xf32> to vector<8xf32>
    %63 = vector.shape_cast %62 : vector<8xf32> to vector<1x8xf32>
    %c0_58 = arith.constant 0 : index
    %c1_59 = arith.constant 1 : index
    %c0_60 = arith.constant 0 : index
    %64 = vector.load %arg5[%c0_58, %c1_59, %c0_60] : memref<1x2x8xf32, #tpu.memory_space<vmem>>, vector<1x1x8xf32>
    %65 = vector.shape_cast %64 : vector<1x1x8xf32> to vector<1x8xf32>
    %66 = vector.shape_cast %63 : vector<1x8xf32> to vector<1x1x8xf32>
    tpu.vector_store %arg5[%c0_58, %c1_59, %c0_60], %66 {strides = array<i32>} : memref<1x2x8xf32, #tpu.memory_space<vmem>>, vector<1x1x8xf32>,
    return
  }
  func.func @transform_0(%arg0: i32) -> (i32, i32, i32, i32) {
    %c0_i32 = arith.constant 0 : i32
    %c0_i32_0 = arith.constant 0 : i32
    %c0_i32_1 = arith.constant 0 : i32
    %c0_i32_2 = arith.constant 0 : i32
    return %arg0, %c0_i32, %c0_i32_0, %c0_i32_1 : i32, i32, i32, i32
  }
  func.func @transform_1(%arg0: i32) -> (i32, i32) {
    %c0_i32 = arith.constant 0 : i32
    %c0_i32_0 = arith.constant 0 : i32
    %c0_i32_1 = arith.constant 0 : i32
    return %c0_i32, %c0_i32_0 : i32, i32
  }
  func.func @transform_2(%arg0: i32) -> (i32, i32) {
    %c0_i32 = arith.constant 0 : i32
    %c0_i32_0 = arith.constant 0 : i32
    %c0_i32_1 = arith.constant 0 : i32
    return %c0_i32, %c0_i32_0 : i32, i32
  }
  func.func @transform_3(%arg0: i32) -> (i32, i32, i32) {
    %c0_i32 = arith.constant 0 : i32
    %c0_i32_0 = arith.constant 0 : i32
    %c0_i32_1 = arith.constant 0 : i32
    return %arg0, %c0_i32, %c0_i32_0 : i32, i32, i32
  }
  func.func @transform_4(%arg0: i32) -> (i32, i32, i32) {
    %c0_i32 = arith.constant 0 : i32
    %c0_i32_0 = arith.constant 0 : i32
    %c0_i32_1 = arith.constant 0 : i32
    return %arg0, %c0_i32, %c0_i32_0 : i32, i32, i32
  }
}

module attributes {stable_mosaic.version = 11 : i64} {
  func.func @kernel(%arg0: i32, %arg1: memref<1x256x8xf32, #tpu.memory_space<vmem>>, %arg2: memref<1x8xf32, #tpu.memory_space<vmem>>, %arg3: memref<1x8xf32, #tpu.memory_space<vmem>>, %arg4: memref<1x8x8x8xf32, #tpu.memory_space<vmem>>) attributes {dimension_semantics = [#tpu.dimension_semantics<parallel>], iteration_bounds = array<i64: 2>, scalar_prefetch = 0 : i64, scratch_operands = 0 : i64, tpu.core_type = #tpu.core_type<tc>, window_params = [{transform_indices = @transform_0, window_bounds = array<i64: 1, 256, 8>}, {pipeline_mode = #tpu.pipeline_mode<synchronous>, transform_indices = @transform_1, window_bounds = array<i64: 1, 8>}, {pipeline_mode = #tpu.pipeline_mode<synchronous>, transform_indices = @transform_2, window_bounds = array<i64: 1, 8>}, {transform_indices = @transform_3, window_bounds = array<i64: 1, 8, 8, 8>}]} {
    %c0 = arith.constant 0 : index
    %c0_0 = arith.constant 0 : index
    %c0_1 = arith.constant 0 : index
    %0 = vector.load %arg1[%c0, %c0_0, %c0_1] : memref<1x256x8xf32, #tpu.memory_space<vmem>>, vector<1x256x8xf32>
    %1 = vector.shape_cast %0 : vector<1x256x8xf32> to vector<256x8xf32>
    %c0_2 = arith.constant 0 : index
    %c0_3 = arith.constant 0 : index
    %2 = vector.load %arg2[%c0_2, %c0_3] : memref<1x8xf32, #tpu.memory_space<vmem>>, vector<1x8xf32>
    %3 = vector.broadcast %2 : vector<1x8xf32> to vector<256x8xf32>
    %4 = arith.mulf %1, %3 : vector<256x8xf32>
    %c0_4 = arith.constant 0 : index
    %c0_5 = arith.constant 0 : index
    %5 = vector.load %arg3[%c0_4, %c0_5] : memref<1x8xf32, #tpu.memory_space<vmem>>, vector<1x8xf32>
    %6 = vector.broadcast %5 : vector<1x8xf32> to vector<256x8xf32>
    %7 = arith.addf %4, %6 : vector<256x8xf32>
    %8 = vector.shape_cast %7 : vector<256x8xf32> to vector<8x2x16x8xf32>
    %9 = vector.extract_strided_slice %8 {offsets = [0, 0, 0, 0], sizes = [8, 1, 16, 8], strides = [1, 1, 1, 1]} : vector<8x2x16x8xf32> to vector<8x1x16x8xf32>
    %10 = vector.shape_cast %9 : vector<8x1x16x8xf32> to vector<8x16x8xf32>
    %11 = vector.extract_strided_slice %8 {offsets = [0, 1, 0, 0], sizes = [8, 1, 16, 8], strides = [1, 1, 1, 1]} : vector<8x2x16x8xf32> to vector<8x1x16x8xf32>
    %12 = vector.shape_cast %11 : vector<8x1x16x8xf32> to vector<8x16x8xf32>
    %13 = arith.maximumf %10, %12 : vector<8x16x8xf32>
    %14 = vector.shape_cast %13 : vector<8x16x8xf32> to vector<8x8x2x8xf32>
    %15 = vector.extract_strided_slice %14 {offsets = [0, 0, 0, 0], sizes = [8, 8, 1, 8], strides = [1, 1, 1, 1]} : vector<8x8x2x8xf32> to vector<8x8x1x8xf32>
    %16 = vector.shape_cast %15 : vector<8x8x1x8xf32> to vector<8x8x8xf32>
    %17 = vector.extract_strided_slice %14 {offsets = [0, 0, 1, 0], sizes = [8, 8, 1, 8], strides = [1, 1, 1, 1]} : vector<8x8x2x8xf32> to vector<8x8x1x8xf32>
    %18 = vector.shape_cast %17 : vector<8x8x1x8xf32> to vector<8x8x8xf32>
    %19 = arith.maximumf %16, %18 : vector<8x8x8xf32>
    %c0_6 = arith.constant 0 : index
    %c0_7 = arith.constant 0 : index
    %c0_8 = arith.constant 0 : index
    %c0_9 = arith.constant 0 : index
    %20 = vector.load %arg4[%c0_6, %c0_7, %c0_8, %c0_9] : memref<1x8x8x8xf32, #tpu.memory_space<vmem>>, vector<1x8x8x8xf32>
    %21 = vector.shape_cast %20 : vector<1x8x8x8xf32> to vector<8x8x8xf32>
    %22 = vector.shape_cast %19 : vector<8x8x8xf32> to vector<1x8x8x8xf32>
    tpu.vector_store %arg4[%c0_6, %c0_7, %c0_8, %c0_9], %22 {strides = array<i32>} : memref<1x8x8x8xf32, #tpu.memory_space<vmem>>, vector<1x8x8x8xf32>,
    return
  }
  func.func @transform_0(%arg0: i32) -> (i32, i32, i32) {
    %c0_i32 = arith.constant 0 : i32
    %c0_i32_0 = arith.constant 0 : i32
    %c0_i32_1 = arith.constant 0 : i32
    return %arg0, %c0_i32, %c0_i32_0 : i32, i32, i32
  }
  func.func @transform_1(%arg0: i32) -> (i32, i32) {
    %c0_i32 = arith.constant 0 : i32
    %c0_i32_0 = arith.constant 0 : i32
    %c0_i32_1 = arith.constant 0 : i32
    return %c0_i32, %c0_i32_0 : i32, i32
  }
  func.func @transform_2(%arg0: i32) -> (i32, i32) {
    %c0_i32 = arith.constant 0 : i32
    %c0_i32_0 = arith.constant 0 : i32
    %c0_i32_1 = arith.constant 0 : i32
    return %c0_i32, %c0_i32_0 : i32, i32
  }
  func.func @transform_3(%arg0: i32) -> (i32, i32, i32, i32) {
    %c0_i32 = arith.constant 0 : i32
    %c0_i32_0 = arith.constant 0 : i32
    %c0_i32_1 = arith.constant 0 : i32
    %c0_i32_2 = arith.constant 0 : i32
    return %arg0, %c0_i32, %c0_i32_0, %c0_i32_1 : i32, i32, i32, i32
  }
}

</mosaic_0001>

<llo_original>
// kernel: cnn_block_forward.3
$region0: #{cnn_block_forward.3}
  #allocation0 [shape = 'u32[]', space=smem, size = 0x4, offset = 0x4, fixed_abs, tag = 'smem constant byte address 0x4 - core index']
  #allocation1 [shape = 'u32[144,128]{1,0:T(1,128)}', space=vmem, size = 0x12000, scoped, tag = 'internal scratch']
  %s0 = inlined_call_operand.vmem [shape: f32[2,256,8], index: 0, kind: input, shape index: {}]
  %s1 = inlined_call_operand.vmem [shape: f32[1,8], index: 1, kind: input, shape index: {}]
  %s2 = inlined_call_operand.vmem [shape: f32[1,8], index: 2, kind: input, shape index: {}]
  %s3 = inlined_call_operand.vmem [shape: f32[2,8,8,8], index: 3, kind: output, shape index: {}]
  %s4 = sld [smem:[#allocation0]]
  $region45: #{cnn_block_forward.3} parent=0
    _
  %s6 = ssub.s32 1, %s4
  %s7 = scalar_select 0, %s6, %s4
  loop: start=0, step=1, limit=4
  $region2: #{cnn_block_forward.3} parent=0 // loop_pre_header
    _
  $region3: #{cnn_block_forward.3} parent=0 // loop_header
    %s9 = sphi 0, %s13
    %p10 = scmp.ge.s32.totalorder %s9, 4
    %s19 = sphi 0, %s21
    %s22 = sphi 0, %s19
    %s23 = sphi 0, %s22
    %s39 = sphi 0, %s23
    %s43 = sphi 0, %s43
    %s45 = sphi 0, %s43
    %s46 = sphi 0, %s45
    %s60 = sphi 0, %s46
    %s64 = sphi 0, %s64
    %s66 = sphi 0, %s64
    %s67 = sphi 0, %s66
    %s81 = sphi 0, %s67
    %s87 = sphi 0, %s89
    %s90 = sphi 0, %s87
    %s91 = sphi 0, %s90
    %s107 = sphi 0, %s91
  $region4: #{cnn_block_forward.3} parent=0 // loop_header_branch
    %12 = sbr.rel (%p10) target = $region8
  $region5: #{cnn_block_forward.3} parent=0 // loop_body
    %s14 = ssub.s32 %s9, 1
    %s15 = ssub.s32 %s9, 2
    %s16 = sadd.s32 %s9, 1
    %s17 = ssub.s32 %s9, %s16
    %p18 = scmp.eq.s32.totalorder %s17, 0
    %s20 = sadd.s32 %s19, 1
    %s21 = scalar_select %p18, %s19, %s20
    %p24 = pneg %p18
    %p25 = scmp.eq.s32.totalorder %s9, 1
    %p26 = por %p24, %p25
    %p27 = scmp.ne.s32.totalorder %s19, %s22
    %p28 = scmp.eq.s32.totalorder %s9, 0
    %p29 = por %p27, %p28
    %p30 = scmp.ne.s32.totalorder %s19, %s22
    %p31 = scmp.eq.s32.totalorder %s14, 1
    %p32 = por %p30, %p31
    %p33 = scmp.ne.s32.totalorder %s22, %s23
    %p34 = scmp.eq.s32.totalorder %s14, 0
    %p35 = por %p33, %p34
    %p36 = scmp.ne.s32.totalorder %s22, %s23
    %p37 = scmp.eq.s32.totalorder %s15, 1
    %p38 = por %p36, %p37
    %p40 = scmp.ne.s32.totalorder %s23, %s39
    %p41 = scmp.eq.s32.totalorder %s15, 0
    %p42 = por %p40, %p41
    %s44 = sadd.s32 %s43, 1
    %p47 = scmp.eq.s32.totalorder %s9, 1
    %p48 = scmp.ne.s32.totalorder %s43, %s45
    %p49 = scmp.eq.s32.totalorder %s9, 0
    %p50 = por %p48, %p49
    %p51 = scmp.ne.s32.totalorder %s43, %s45
    %p52 = scmp.eq.s32.totalorder %s14, 1
    %p53 = por %p51, %p52
    %p54 = scmp.ne.s32.totalorder %s45, %s46
    %p55 = scmp.eq.s32.totalorder %s14, 0
    %p56 = por %p54, %p55
    %p57 = scmp.ne.s32.totalorder %s45, %s46
    %p58 = scmp.eq.s32.totalorder %s15, 1
    %p59 = por %p57, %p58
    %p61 = scmp.ne.s32.totalorder %s46, %s60
    %p62 = scmp.eq.s32.totalorder %s15, 0
    %p63 = por %p61, %p62
    %s65 = sadd.s32 %s64, 1
    %p68 = scmp.eq.s32.totalorder %s9, 1
    %p69 = scmp.ne.s32.totalorder %s64, %s66
    %p70 = scmp.eq.s32.totalorder %s9, 0
    %p71 = por %p69, %p70
    %p72 = scmp.ne.s32.totalorder %s64, %s66
    %p73 = scmp.eq.s32.totalorder %s14, 1
    %p74 = por %p72, %p73
    %p75 = scmp.ne.s32.totalorder %s66, %s67
    %p76 = scmp.eq.s32.totalorder %s14, 0
    %p77 = por %p75, %p76
    %p78 = scmp.ne.s32.totalorder %s66, %s67
    %p79 = scmp.eq.s32.totalorder %s15, 1
    %p80 = por %p78, %p79
    %p82 = scmp.ne.s32.totalorder %s67, %s81
    %p83 = scmp.eq.s32.totalorder %s15, 0
    %p84 = por %p82, %p83
    %s85 = ssub.s32 %s9, %s16
    %p86 = scmp.eq.s32.totalorder %s85, 0
    %s88 = sadd.s32 %s87, 1
    %s89 = scalar_select %p86, %s87, %s88
    %p92 = pneg %p86
    %p93 = scmp.eq.s32.totalorder %s9, 1
    %p94 = por %p92, %p93
    %p95 = scmp.ne.s32.totalorder %s87, %s90
    %p96 = scmp.eq.s32.totalorder %s9, 0
    %p97 = por %p95, %p96
    %p98 = scmp.ne.s32.totalorder %s87, %s90
    %p99 = scmp.eq.s32.totalorder %s14, 1
    %p100 = por %p98, %p99
    %p101 = scmp.ne.s32.totalorder %s90, %s91
    %p102 = scmp.eq.s32.totalorder %s14, 0
    %p103 = por %p101, %p102
    %p104 = scmp.ne.s32.totalorder %s90, %s91
    %p105 = scmp.eq.s32.totalorder %s15, 1
    %p106 = por %p104, %p105
    %p108 = scmp.ne.s32.totalorder %s91, %s107
    %p109 = scmp.eq.s32.totalorder %s15, 0
    %p110 = por %p108, %p109
    %p111 = scmp.le.s32.totalorder 1, %s9
    %p112 = scmp.lt.s32.totalorder %s9, 3
    %p113 = pnand %p111, %p112
    %p114 = pneg %p113
    // Predicated region
    $region9: #{cnn_block_forward.3} parent=5 // pred_check
      _
    $region10: #{cnn_block_forward.3} parent=5 // pred_check_branch
      %116 = sbr.rel (%p113) target = $region12
    $region11: #{cnn_block_forward.3} parent=5 // pred_region
      %s117 = ssub.s32 %s9, 1
      // Predicated region
      $region13: #{cnn_block_forward.3} parent=11 // pred_check
        %p118 = pneg %p56
      $region14: #{cnn_block_forward.3} parent=11 // pred_check_branch
        %120 = sbr.rel (%p118) target = $region16
      $region15: #{cnn_block_forward.3} parent=11 // pred_region
        _
      $region16: #{cnn_block_forward.3} parent=11 // pred_fallthru
        _
      // Predicated region
      $region17: #{cnn_block_forward.3} parent=11 // pred_check
        %p121 = pneg %p77
      $region18: #{cnn_block_forward.3} parent=11 // pred_check_branch
        %123 = sbr.rel (%p121) target = $region20
      $region19: #{cnn_block_forward.3} parent=11 // pred_region
        _
      $region20: #{cnn_block_forward.3} parent=11 // pred_fallthru
        _
    $region12: #{cnn_block_forward.3} parent=5 // pred_fallthru
      _
    %p124 = scmp.lt.s32.totalorder %s9, 2
    // Predicated region
    $region21: #{cnn_block_forward.3} parent=5 // pred_check
      %p125 = pneg %p124
    $region22: #{cnn_block_forward.3} parent=5 // pred_check_branch
      %127 = sbr.rel (%p125) target = $region24
    $region23: #{cnn_block_forward.3} parent=5 // pred_region
      // Predicated region
      $region25: #{cnn_block_forward.3} parent=23 // pred_check
        %p128 = pneg %p29
      $region26: #{cnn_block_forward.3} parent=23 // pred_check_branch
        %130 = sbr.rel (%p128) target = $region28
      $region27: #{cnn_block_forward.3} parent=23 // pred_region
        %p131 = scmp.lt.s32.totalorder %s9, 1
        %s132 = scalar_select %p131, %s9, 1
        %s133 = smul.addr %s132, 32
        %s134 = smul.addr %s133, 8
        %s135 = scalar_lea.vmem %s0, %s134
      $region28: #{cnn_block_forward.3} parent=23 // pred_fallthru
        _
    $region24: #{cnn_block_forward.3} parent=5 // pred_fallthru
      _
    %p136 = scmp.le.s32.totalorder 1, %s9
    %p137 = scmp.lt.s32.totalorder %s9, 3
    %p138 = pnand %p136, %p137
    %p139 = pneg %p138
    // Predicated region
    $region29: #{cnn_block_forward.3} parent=5 // pred_check
      _
    $region30: #{cnn_block_forward.3} parent=5 // pred_check_branch
      %141 = sbr.rel (%p138) target = $region32
    $region31: #{cnn_block_forward.3} parent=5 // pred_region
      %s142 = ssub.s32 %s9, 1
      %p143 = scmp.lt.s32.totalorder %s14, 1
      %s144 = scalar_select %p143, %s14, 1
      %s145 = smul.addr %s144, 32
      %s146 = smul.addr %s145, 8
      %s147 = scalar_lea.vmem %s0, %s146
      %p148 = pneg %p35
      %p149 = pneg %p32
      %p150 = pneg %p56
      %p151 = pneg %p53
      %p152 = pneg %p77
      %p153 = pneg %p74
      %p154 = pneg %p103
      %p155 = pneg %p100
      %p156 = scmp.lt.s32.totalorder %s14, 1
      %s157 = scalar_select %p156, %s14, 1
      %s158 = smul.addr %s157, 8
      %s159 = smul.addr %s158, 8
      %s160 = scalar_lea.vmem %s3, %s159
      %p161 = scmp.lt.s32.totalorder %s14, 1
      %s162 = scalar_select %p161, %s14, 1
      %s163 = smul.addr %s162, 32
      %s164 = smul.addr %s163, 8
      %s165 = scalar_lea.vmem %s0, %s164
      %p166 = scmp.lt.s32.totalorder %s14, 1
      %s167 = scalar_select %p166, %s14, 1
      %s168 = smul.addr %s167, 8
      %s169 = smul.addr %s168, 8
      %s170 = scalar_lea.vmem %s3, %s169
      %v171 = vld [vmem:[%s165] sm:$0xff]
      %v172 = vld [vmem:[%s165 + $0x8] sm:$0xff]
      %v173 = vld [vmem:[%s165 + $0x10] sm:$0xff]
      %v174 = vld [vmem:[%s165 + $0x18] sm:$0xff]
      %v175 = vld [vmem:[%s165 + $0x20] sm:$0xff]
      %v176 = vld [vmem:[%s165 + $0x28] sm:$0xff]
      %v177 = vld [vmem:[%s165 + $0x30] sm:$0xff]
      %v178 = vld [vmem:[%s165 + $0x38] sm:$0xff]
      %v179 = vld [vmem:[%s165 + $0x40] sm:$0xff]
      %v180 = vld [vmem:[%s165 + $0x48] sm:$0xff]
      %v181 = vld [vmem:[%s165 + $0x50] sm:$0xff]
      %v182 = vld [vmem:[%s165 + $0x58] sm:$0xff]
      %v183 = vld [vmem:[%s165 + $0x60] sm:$0xff]
      %v184 = vld [vmem:[%s165 + $0x68] sm:$0xff]
      %v185 = vld [vmem:[%s165 + $0x70] sm:$0xff]
      %v186 = vld [vmem:[%s165 + $0x78] sm:$0xff]
      %v187 = vld [vmem:[%s165 + $0x80] sm:$0xff]
      %v188 = vld [vmem:[%s165 + $0x88] sm:$0xff]
      %v189 = vld [vmem:[%s165 + $0x90] sm:$0xff]
      %v190 = vld [vmem:[%s165 + $0x98] sm:$0xff]
      %v191 = vld [vmem:[%s165 + $0xa0] sm:$0xff]
      %v192 = vld [vmem:[%s165 + $0xa8] sm:$0xff]
      %v193 = vld [vmem:[%s165 + $0xb0] sm:$0xff]
      %v194 = vld [vmem:[%s165 + $0xb8] sm:$0xff]
      %v195 = vld [vmem:[%s165 + $0xc0] sm:$0xff]
      %v196 = vld [vmem:[%s165 + $0xc8] sm:$0xff]
      %v197 = vld [vmem:[%s165 + $0xd0] sm:$0xff]
      %v198 = vld [vmem:[%s165 + $0xd8] sm:$0xff]
      %v199 = vld [vmem:[%s165 + $0xe0] sm:$0xff]
      %v200 = vld [vmem:[%s165 + $0xe8] sm:$0xff]
      %v201 = vld [vmem:[%s165 + $0xf0] sm:$0xff]
      %v202 = vld [vmem:[%s165 + $0xf8] sm:$0xff]
      %v203 = vld [vmem:[%s1] sm:$0x1]
      %v205 = vlaneseq
      %v206 = vshrl.u32 %v205, 7
      %v207 = vsub.s32 0, %v206
      %v208 = vrot.slane %v203, %v207
      %v210 = vmul.f32 %v171, %v208
      %v211 = vmul.f32 %v172, %v208
      %v212 = vmul.f32 %v173, %v208
      %v213 = vmul.f32 %v174, %v208
      %v214 = vmul.f32 %v175, %v208
      %v215 = vmul.f32 %v176, %v208
      %v216 = vmul.f32 %v177, %v208
      %v217 = vmul.f32 %v178, %v208
      %v218 = vmul.f32 %v179, %v208
      %v219 = vmul.f32 %v180, %v208
      %v220 = vmul.f32 %v181, %v208
      %v221 = vmul.f32 %v182, %v208
      %v222 = vmul.f32 %v183, %v208
      %v223 = vmul.f32 %v184, %v208
      %v224 = vmul.f32 %v185, %v208
      %v225 = vmul.f32 %v186, %v208
      %v226 = vmul.f32 %v187, %v208
      %v227 = vmul.f32 %v188, %v208
      %v228 = vmul.f32 %v189, %v208
      %v229 = vmul.f32 %v190, %v208
      %v230 = vmul.f32 %v191, %v208
      %v231 = vmul.f32 %v192, %v208
      %v232 = vmul.f32 %v193, %v208
      %v233 = vmul.f32 %v194, %v208
      %v234 = vmul.f32 %v195, %v208
      %v235 = vmul.f32 %v196, %v208
      %v236 = vmul.f32 %v197, %v208
      %v237 = vmul.f32 %v198, %v208
      %v238 = vmul.f32 %v199, %v208
      %v239 = vmul.f32 %v200, %v208
      %v240 = vmul.f32 %v201, %v208
      %v241 = vmul.f32 %v202, %v208
      %v242 = vld [vmem:[%s2] sm:$0x1]
      %v244 = vlaneseq
      %v245 = vshrl.u32 %v244, 7
      %v246 = vsub.s32 0, %v245
      %v247 = vrot.slane %v242, %v246
      %v249 = vadd.f32 %v210, %v247
      %v250 = vadd.f32 %v211, %v247
      %v251 = vadd.f32 %v212, %v247
      %v252 = vadd.f32 %v213, %v247
      %v253 = vadd.f32 %v214, %v247
      %v254 = vadd.f32 %v215, %v247
      %v255 = vadd.f32 %v216, %v247
      %v256 = vadd.f32 %v217, %v247
      %v257 = vadd.f32 %v218, %v247
      %v258 = vadd.f32 %v219, %v247
      %v259 = vadd.f32 %v220, %v247
      %v260 = vadd.f32 %v221, %v247
      %v261 = vadd.f32 %v222, %v247
      %v262 = vadd.f32 %v223, %v247
      %v263 = vadd.f32 %v224, %v247
      %v264 = vadd.f32 %v225, %v247
      %v265 = vadd.f32 %v226, %v247
      %v266 = vadd.f32 %v227, %v247
      %v267 = vadd.f32 %v228, %v247
      %v268 = vadd.f32 %v229, %v247
      %v269 = vadd.f32 %v230, %v247
      %v270 = vadd.f32 %v231, %v247
      %v271 = vadd.f32 %v232, %v247
      %v272 = vadd.f32 %v233, %v247
      %v273 = vadd.f32 %v234, %v247
      %v274 = vadd.f32 %v235, %v247
      %v275 = vadd.f32 %v236, %v247
      %v276 = vadd.f32 %v237, %v247
      %v277 = vadd.f32 %v238, %v247
      %v278 = vadd.f32 %v239, %v247
      %v279 = vadd.f32 %v240, %v247
      %v280 = vadd.f32 %v241, %v247
      %v281 = vmax.f32 %v249, %v251
      %v282 = vmax.f32 %v250, %v252
      %v283 = vmax.f32 %v253, %v255
      %v284 = vmax.f32 %v254, %v256
      %v285 = vmax.f32 %v257, %v259
      %v286 = vmax.f32 %v258, %v260
      %v287 = vmax.f32 %v261, %v263
      %v288 = vmax.f32 %v262, %v264
      %v289 = vmax.f32 %v265, %v267
      %v290 = vmax.f32 %v266, %v268
      %v291 = vmax.f32 %v269, %v271
      %v292 = vmax.f32 %v270, %v272
      %v293 = vmax.f32 %v273, %v275
      %v294 = vmax.f32 %v274, %v276
      %v295 = vmax.f32 %v277, %v279
      %v296 = vmax.f32 %v278, %v280
      %v313 = vcombine.high %v281, %v281
      %v315 = vunpack.c.l.s4 1983009808
      %v316 = vunpack.c.0.s8 %v315
      %v317 = vlaneseq
      %v318 = vshrl.u32 %v317, 7
      %v319 = vsub.s32 %v316, %v318
      %v320 = vrot.slane %v281, %v319
      %v322 = vunpack.c.l.s4 1983009808
      %v323 = vunpack.c.0.s8 %v322
      %v324 = vlaneseq
      %v325 = vshrl.u32 %v324, 7
      %v326 = vsub.s32 %v323, %v325
      %v327 = vrot.slane %v313, %v326
      %v328 = vcombine.high %v320, %v320
      %v329 = vcombine.high %v327, %v327
      %v330 = vcombine.high %v282, %v282
      %v332 = vunpack.c.l.s4 1983009808
      %v333 = vunpack.c.0.s8 %v332
      %v334 = vlaneseq
      %v335 = vshrl.u32 %v334, 7
      %v336 = vsub.s32 %v333, %v335
      %v337 = vrot.slane %v282, %v336
      %v339 = vunpack.c.l.s4 1983009808
      %v340 = vunpack.c.0.s8 %v339
      %v341 = vlaneseq
      %v342 = vshrl.u32 %v341, 7
      %v343 = vsub.s32 %v340, %v342
      %v344 = vrot.slane %v330, %v343
      %v345 = vcombine.high %v337, %v337
      %v346 = vcombine.high %v344, %v344
      %v347 = vcombine.high %v283, %v283
      %v349 = vunpack.c.l.s4 1983009808
      %v350 = vunpack.c.0.s8 %v349
      %v351 = vlaneseq
      %v352 = vshrl.u32 %v351, 7
      %v353 = vsub.s32 %v350, %v352
      %v354 = vrot.slane %v283, %v353
      %v356 = vunpack.c.l.s4 1983009808
      %v357 = vunpack.c.0.s8 %v356
      %v358 = vlaneseq
      %v359 = vshrl.u32 %v358, 7
      %v360 = vsub.s32 %v357, %v359
      %v361 = vrot.slane %v347, %v360
      %v362 = vcombine.high %v354, %v354
      %v363 = vcombine.high %v361, %v361
      %v364 = vcombine.high %v284, %v284
      %v366 = vunpack.c.l.s4 1983009808
      %v367 = vunpack.c.0.s8 %v366
      %v368 = vlaneseq
      %v369 = vshrl.u32 %v368, 7
      %v370 = vsub.s32 %v367, %v369
      %v371 = vrot.slane %v284, %v370
      %v373 = vunpack.c.l.s4 1983009808
      %v374 = vunpack.c.0.s8 %v373
      %v375 = vlaneseq
      %v376 = vshrl.u32 %v375, 7
      %v377 = vsub.s32 %v374, %v376
      %v378 = vrot.slane %v364, %v377
      %v379 = vcombine.high %v371, %v371
      %v380 = vcombine.high %v378, %v378
      %v381 = vcombine.high %v285, %v285
      %v383 = vunpack.c.l.s4 1983009808
      %v384 = vunpack.c.0.s8 %v383
      %v385 = vlaneseq
      %v386 = vshrl.u32 %v385, 7
      %v387 = vsub.s32 %v384, %v386
      %v388 = vrot.slane %v285, %v387
      %v390 = vunpack.c.l.s4 1983009808
      %v391 = vunpack.c.0.s8 %v390
      %v392 = vlaneseq
      %v393 = vshrl.u32 %v392, 7
      %v394 = vsub.s32 %v391, %v393
      %v395 = vrot.slane %v381, %v394
      %v396 = vcombine.high %v388, %v388
      %v397 = vcombine.high %v395, %v395
      %v398 = vcombine.high %v286, %v286
      %v400 = vunpack.c.l.s4 1983009808
      %v401 = vunpack.c.0.s8 %v400
      %v402 = vlaneseq
      %v403 = vshrl.u32 %v402, 7
      %v404 = vsub.s32 %v401, %v403
      %v405 = vrot.slane %v286, %v404
      %v407 = vunpack.c.l.s4 1983009808
      %v408 = vunpack.c.0.s8 %v407
      %v409 = vlaneseq
      %v410 = vshrl.u32 %v409, 7
      %v411 = vsub.s32 %v408, %v410
      %v412 = vrot.slane %v398, %v411
      %v413 = vcombine.high %v405, %v405
      %v414 = vcombine.high %v412, %v412
      %v415 = vcombine.high %v287, %v287
      %v417 = vunpack.c.l.s4 1983009808
      %v418 = vunpack.c.0.s8 %v417
      %v419 = vlaneseq
      %v420 = vshrl.u32 %v419, 7
      %v421 = vsub.s32 %v418, %v420
      %v422 = vrot.slane %v287, %v421
      %v424 = vunpack.c.l.s4 1983009808
      %v425 = vunpack.c.0.s8 %v424
      %v426 = vlaneseq
      %v427 = vshrl.u32 %v426, 7
      %v428 = vsub.s32 %v425, %v427
      %v429 = vrot.slane %v415, %v428
      %v430 = vcombine.high %v422, %v422
      %v431 = vcombine.high %v429, %v429
      %v432 = vcombine.high %v288, %v288
      %v434 = vunpack.c.l.s4 1983009808
      %v435 = vunpack.c.0.s8 %v434
      %v436 = vlaneseq
      %v437 = vshrl.u32 %v436, 7
      %v438 = vsub.s32 %v435, %v437
      %v439 = vrot.slane %v288, %v438
      %v441 = vunpack.c.l.s4 1983009808
      %v442 = vunpack.c.0.s8 %v441
      %v443 = vlaneseq
      %v444 = vshrl.u32 %v443, 7
      %v445 = vsub.s32 %v442, %v444
      %v446 = vrot.slane %v432, %v445
      %v447 = vcombine.high %v439, %v439
      %v448 = vcombine.high %v446, %v446
      %v449 = vcombine.high %v289, %v289
      %v451 = vunpack.c.l.s4 1983009808
      %v452 = vunpack.c.0.s8 %v451
      %v453 = vlaneseq
      %v454 = vshrl.u32 %v453, 7
      %v455 = vsub.s32 %v452, %v454
      %v456 = vrot.slane %v289, %v455
      %v458 = vunpack.c.l.s4 1983009808
      %v459 = vunpack.c.0.s8 %v458
      %v460 = vlaneseq
      %v461 = vshrl.u32 %v460, 7
      %v462 = vsub.s32 %v459, %v461
      %v463 = vrot.slane %v449, %v462
      %v464 = vcombine.high %v456, %v456
      %v465 = vcombine.high %v463, %v463
      %v466 = vcombine.high %v290, %v290
      %v468 = vunpack.c.l.s4 1983009808
      %v469 = vunpack.c.0.s8 %v468
      %v470 = vlaneseq
      %v471 = vshrl.u32 %v470, 7
      %v472 = vsub.s32 %v469, %v471
      %v473 = vrot.slane %v290, %v472
      %v475 = vunpack.c.l.s4 1983009808
      %v476 = vunpack.c.0.s8 %v475
      %v477 = vlaneseq
      %v478 = vshrl.u32 %v477, 7
      %v479 = vsub.s32 %v476, %v478
      %v480 = vrot.slane %v466, %v479
      %v481 = vcombine.high %v473, %v473
      %v482 = vcombine.high %v480, %v480
      %v483 = vcombine.high %v291, %v291
      %v485 = vunpack.c.l.s4 1983009808
      %v486 = vunpack.c.0.s8 %v485
      %v487 = vlaneseq
      %v488 = vshrl.u32 %v487, 7
      %v489 = vsub.s32 %v486, %v488
      %v490 = vrot.slane %v291, %v489
      %v492 = vunpack.c.l.s4 1983009808
      %v493 = vunpack.c.0.s8 %v492
      %v494 = vlaneseq
      %v495 = vshrl.u32 %v494, 7
      %v496 = vsub.s32 %v493, %v495
      %v497 = vrot.slane %v483, %v496
      %v498 = vcombine.high %v490, %v490
      %v499 = vcombine.high %v497, %v497
      %v500 = vcombine.high %v292, %v292
      %v502 = vunpack.c.l.s4 1983009808
      %v503 = vunpack.c.0.s8 %v502
      %v504 = vlaneseq
      %v505 = vshrl.u32 %v504, 7
      %v506 = vsub.s32 %v503, %v505
      %v507 = vrot.slane %v292, %v506
      %v509 = vunpack.c.l.s4 1983009808
      %v510 = vunpack.c.0.s8 %v509
      %v511 = vlaneseq
      %v512 = vshrl.u32 %v511, 7
      %v513 = vsub.s32 %v510, %v512
      %v514 = vrot.slane %v500, %v513
      %v515 = vcombine.high %v507, %v507
      %v516 = vcombine.high %v514, %v514
      %v517 = vcombine.high %v293, %v293
      %v519 = vunpack.c.l.s4 1983009808
      %v520 = vunpack.c.0.s8 %v519
      %v521 = vlaneseq
      %v522 = vshrl.u32 %v521, 7
      %v523 = vsub.s32 %v520, %v522
      %v524 = vrot.slane %v293, %v523
      %v526 = vunpack.c.l.s4 1983009808
      %v527 = vunpack.c.0.s8 %v526
      %v528 = vlaneseq
      %v529 = vshrl.u32 %v528, 7
      %v530 = vsub.s32 %v527, %v529
      %v531 = vrot.slane %v517, %v530
      %v532 = vcombine.high %v524, %v524
      %v533 = vcombine.high %v531, %v531
      %v534 = vcombine.high %v294, %v294
      %v536 = vunpack.c.l.s4 1983009808
      %v537 = vunpack.c.0.s8 %v536
      %v538 = vlaneseq
      %v539 = vshrl.u32 %v538, 7
      %v540 = vsub.s32 %v537, %v539
      %v541 = vrot.slane %v294, %v540
      %v543 = vunpack.c.l.s4 1983009808
      %v544 = vunpack.c.0.s8 %v543
      %v545 = vlaneseq
      %v546 = vshrl.u32 %v545, 7
      %v547 = vsub.s32 %v544, %v546
      %v548 = vrot.slane %v534, %v547
      %v549 = vcombine.high %v541, %v541
      %v550 = vcombine.high %v548, %v548
      %v551 = vcombine.high %v295, %v295
      %v553 = vunpack.c.l.s4 1983009808
      %v554 = vunpack.c.0.s8 %v553
      %v555 = vlaneseq
      %v556 = vshrl.u32 %v555, 7
      %v557 = vsub.s32 %v554, %v556
      %v558 = vrot.slane %v295, %v557
      %v560 = vunpack.c.l.s4 1983009808
      %v561 = vunpack.c.0.s8 %v560
      %v562 = vlaneseq
      %v563 = vshrl.u32 %v562, 7
      %v564 = vsub.s32 %v561, %v563
      %v565 = vrot.slane %v551, %v564
      %v566 = vcombine.high %v558, %v558
      %v567 = vcombine.high %v565, %v565
      %v568 = vcombine.high %v296, %v296
      %v570 = vunpack.c.l.s4 1983009808
      %v571 = vunpack.c.0.s8 %v570
      %v572 = vlaneseq
      %v573 = vshrl.u32 %v572, 7
      %v574 = vsub.s32 %v571, %v573
      %v575 = vrot.slane %v296, %v574
      %v577 = vunpack.c.l.s4 1983009808
      %v578 = vunpack.c.0.s8 %v577
      %v579 = vlaneseq
      %v580 = vshrl.u32 %v579, 7
      %v581 = vsub.s32 %v578, %v580
      %v582 = vrot.slane %v568, %v581
      %v583 = vcombine.high %v575, %v575
      %v584 = vcombine.high %v582, %v582
      %v649 = vrot.slane %v320, 7
      %v650 = vrot.slane %v649, 2
      %v651 = vrot.slane %v328, 7
      %v652 = vrot.slane %v651, 2
      %v653 = vrot.slane %v327, 7
      %v654 = vrot.slane %v653, 2
      %v655 = vrot.slane %v329, 7
      %v656 = vrot.slane %v655, 2
      %v657 = vrot.slane %v337, 7
      %v658 = vrot.slane %v657, 2
      %v659 = vrot.slane %v345, 7
      %v660 = vrot.slane %v659, 2
      %v661 = vrot.slane %v344, 7
      %v662 = vrot.slane %v661, 2
      %v663 = vrot.slane %v346, 7
      %v664 = vrot.slane %v663, 2
      %v665 = vrot.slane %v354, 7
      %v666 = vrot.slane %v665, 2
      %v667 = vrot.slane %v362, 7
      %v668 = vrot.slane %v667, 2
      %v669 = vrot.slane %v361, 7
      %v670 = vrot.slane %v669, 2
      %v671 = vrot.slane %v363, 7
      %v672 = vrot.slane %v671, 2
      %v673 = vrot.slane %v371, 7
      %v674 = vrot.slane %v673, 2
      %v675 = vrot.slane %v379, 7
      %v676 = vrot.slane %v675, 2
      %v677 = vrot.slane %v378, 7
      %v678 = vrot.slane %v677, 2
      %v679 = vrot.slane %v380, 7
      %v680 = vrot.slane %v679, 2
      %v681 = vrot.slane %v388, 7
      %v682 = vrot.slane %v681, 2
      %v683 = vrot.slane %v396, 7
      %v684 = vrot.slane %v683, 2
      %v685 = vrot.slane %v395, 7
      %v686 = vrot.slane %v685, 2
      %v687 = vrot.slane %v397, 7
      %v688 = vrot.slane %v687, 2
      %v689 = vrot.slane %v405, 7
      %v690 = vrot.slane %v689, 2
      %v691 = vrot.slane %v413, 7
      %v692 = vrot.slane %v691, 2
      %v693 = vrot.slane %v412, 7
      %v694 = vrot.slane %v693, 2
      %v695 = vrot.slane %v414, 7
      %v696 = vrot.slane %v695, 2
      %v697 = vrot.slane %v422, 7
      %v698 = vrot.slane %v697, 2
      %v699 = vrot.slane %v430, 7
      %v700 = vrot.slane %v699, 2
      %v701 = vrot.slane %v429, 7
      %v702 = vrot.slane %v701, 2
      %v703 = vrot.slane %v431, 7
      %v704 = vrot.slane %v703, 2
      %v705 = vrot.slane %v439, 7
      %v706 = vrot.slane %v705, 2
      %v707 = vrot.slane %v447, 7
      %v708 = vrot.slane %v707, 2
      %v709 = vrot.slane %v446, 7
      %v710 = vrot.slane %v709, 2
      %v711 = vrot.slane %v448, 7
      %v712 = vrot.slane %v711, 2
      %v713 = vrot.slane %v456, 7
      %v714 = vrot.slane %v713, 2
      %v715 = vrot.slane %v464, 7
      %v716 = vrot.slane %v715, 2
      %v717 = vrot.slane %v463, 7
      %v718 = vrot.slane %v717, 2
      %v719 = vrot.slane %v465, 7
      %v720 = vrot.slane %v719, 2
      %v721 = vrot.slane %v473, 7
      %v722 = vrot.slane %v721, 2
      %v723 = vrot.slane %v481, 7
      %v724 = vrot.slane %v723, 2
      %v725 = vrot.slane %v480, 7
      %v726 = vrot.slane %v725, 2
      %v727 = vrot.slane %v482, 7
      %v728 = vrot.slane %v727, 2
      %v729 = vrot.slane %v490, 7
      %v730 = vrot.slane %v729, 2
      %v731 = vrot.slane %v498, 7
      %v732 = vrot.slane %v731, 2
      %v733 = vrot.slane %v497, 7
      %v734 = vrot.slane %v733, 2
      %v735 = vrot.slane %v499, 7
      %v736 = vrot.slane %v735, 2
      %v737 = vrot.slane %v507, 7
      %v738 = vrot.slane %v737, 2
      %v739 = vrot.slane %v515, 7
      %v740 = vrot.slane %v739, 2
      %v741 = vrot.slane %v514, 7
      %v742 = vrot.slane %v741, 2
      %v743 = vrot.slane %v516, 7
      %v744 = vrot.slane %v743, 2
      %v745 = vrot.slane %v524, 7
      %v746 = vrot.slane %v745, 2
      %v747 = vrot.slane %v532, 7
      %v748 = vrot.slane %v747, 2
      %v749 = vrot.slane %v531, 7
      %v750 = vrot.slane %v749, 2
      %v751 = vrot.slane %v533, 7
      %v752 = vrot.slane %v751, 2
      %v753 = vrot.slane %v541, 7
      %v754 = vrot.slane %v753, 2
      %v755 = vrot.slane %v549, 7
      %v756 = vrot.slane %v755, 2
      %v757 = vrot.slane %v548, 7
      %v758 = vrot.slane %v757, 2
      %v759 = vrot.slane %v550, 7
      %v760 = vrot.slane %v759, 2
      %v761 = vrot.slane %v558, 7
      %v762 = vrot.slane %v761, 2
      %v763 = vrot.slane %v566, 7
      %v764 = vrot.slane %v763, 2
      %v765 = vrot.slane %v565, 7
      %v766 = vrot.slane %v765, 2
      %v767 = vrot.slane %v567, 7
      %v768 = vrot.slane %v767, 2
      %v769 = vrot.slane %v575, 7
      %v770 = vrot.slane %v769, 2
      %v771 = vrot.slane %v583, 7
      %v772 = vrot.slane %v771, 2
      %v773 = vrot.slane %v582, 7
      %v774 = vrot.slane %v773, 2
      %v775 = vrot.slane %v584, 7
      %v776 = vrot.slane %v775, 2
      %v841 = vmax.f32 %v320, %v650
      %v842 = vmax.f32 %v328, %v652
      %v843 = vmax.f32 %v327, %v654
      %v844 = vmax.f32 %v329, %v656
      %v845 = vmax.f32 %v337, %v658
      %v846 = vmax.f32 %v345, %v660
      %v847 = vmax.f32 %v344, %v662
      %v848 = vmax.f32 %v346, %v664
      %v849 = vmax.f32 %v354, %v666
      %v850 = vmax.f32 %v362, %v668
      %v851 = vmax.f32 %v361, %v670
      %v852 = vmax.f32 %v363, %v672
      %v853 = vmax.f32 %v371, %v674
      %v854 = vmax.f32 %v379, %v676
      %v855 = vmax.f32 %v378, %v678
      %v856 = vmax.f32 %v380, %v680
      %v857 = vmax.f32 %v388, %v682
      %v858 = vmax.f32 %v396, %v684
      %v859 = vmax.f32 %v395, %v686
      %v860 = vmax.f32 %v397, %v688
      %v861 = vmax.f32 %v405, %v690
      %v862 = vmax.f32 %v413, %v692
      %v863 = vmax.f32 %v412, %v694
      %v864 = vmax.f32 %v414, %v696
      %v865 = vmax.f32 %v422, %v698
      %v866 = vmax.f32 %v430, %v700
      %v867 = vmax.f32 %v429, %v702
      %v868 = vmax.f32 %v431, %v704
      %v869 = vmax.f32 %v439, %v706
      %v870 = vmax.f32 %v447, %v708
      %v871 = vmax.f32 %v446, %v710
      %v872 = vmax.f32 %v448, %v712
      %v873 = vmax.f32 %v456, %v714
      %v874 = vmax.f32 %v464, %v716
      %v875 = vmax.f32 %v463, %v718
      %v876 = vmax.f32 %v465, %v720
      %v877 = vmax.f32 %v473, %v722
      %v878 = vmax.f32 %v481, %v724
      %v879 = vmax.f32 %v480, %v726
      %v880 = vmax.f32 %v482, %v728
      %v881 = vmax.f32 %v490, %v730
      %v882 = vmax.f32 %v498, %v732
      %v883 = vmax.f32 %v497, %v734
      %v884 = vmax.f32 %v499, %v736
      %v885 = vmax.f32 %v507, %v738
      %v886 = vmax.f32 %v515, %v740
      %v887 = vmax.f32 %v514, %v742
      %v888 = vmax.f32 %v516, %v744
      %v889 = vmax.f32 %v524, %v746
      %v890 = vmax.f32 %v532, %v748
      %v891 = vmax.f32 %v531, %v750
      %v892 = vmax.f32 %v533, %v752
      %v893 = vmax.f32 %v541, %v754
      %v894 = vmax.f32 %v549, %v756
      %v895 = vmax.f32 %v548, %v758
      %v896 = vmax.f32 %v550, %v760
      %v897 = vmax.f32 %v558, %v762
      %v898 = vmax.f32 %v566, %v764
      %v899 = vmax.f32 %v565, %v766
      %v900 = vmax.f32 %v567, %v768
      %v901 = vmax.f32 %v575, %v770
      %v902 = vmax.f32 %v583, %v772
      %v903 = vmax.f32 %v582, %v774
      %v904 = vmax.f32 %v584, %v776
      %v969 = vlaneseq
      %v970 = vshrl.u32 %v969, 7
      %v971 = vsub.s32 0, %v970
      %v972 = vrot.slane %v841, %v971
      %v973 = vlaneseq
      %v974 = vshrl.u32 %v973, 7
      %v975 = vsub.s32 0, %v974
      %v976 = vrot.slane %v842, %v975
      %v977 = vlaneseq
      %v978 = vshrl.u32 %v977, 7
      %v979 = vsub.s32 0, %v978
      %v980 = vrot.slane %v843, %v979
      %v981 = vlaneseq
      %v982 = vshrl.u32 %v981, 7
      %v983 = vsub.s32 0, %v982
      %v984 = vrot.slane %v844, %v983
      %v985 = vlaneseq
      %v986 = vshrl.u32 %v985, 7
      %v987 = vsub.s32 0, %v986
      %v988 = vrot.slane %v845, %v987
      %v989 = vlaneseq
      %v990 = vshrl.u32 %v989, 7
      %v991 = vsub.s32 0, %v990
      %v992 = vrot.slane %v846, %v991
      %v993 = vlaneseq
      %v994 = vshrl.u32 %v993, 7
      %v995 = vsub.s32 0, %v994
      %v996 = vrot.slane %v847, %v995
      %v997 = vlaneseq
      %v998 = vshrl.u32 %v997, 7
      %v999 = vsub.s32 0, %v998
      %v1000 = vrot.slane %v848, %v999
      %v1001 = vlaneseq
      %v1002 = vshrl.u32 %v1001, 7
      %v1003 = vsub.s32 0, %v1002
      %v1004 = vrot.slane %v849, %v1003
      %v1005 = vlaneseq
      %v1006 = vshrl.u32 %v1005, 7
      %v1007 = vsub.s32 0, %v1006
      %v1008 = vrot.slane %v850, %v1007
      %v1009 = vlaneseq
      %v1010 = vshrl.u32 %v1009, 7
      %v1011 = vsub.s32 0, %v1010
      %v1012 = vrot.slane %v851, %v1011
      %v1013 = vlaneseq
      %v1014 = vshrl.u32 %v1013, 7
      %v1015 = vsub.s32 0, %v1014
      %v1016 = vrot.slane %v852, %v1015
      %v1017 = vlaneseq
      %v1018 = vshrl.u32 %v1017, 7
      %v1019 = vsub.s32 0, %v1018
      %v1020 = vrot.slane %v853, %v1019
      %v1021 = vlaneseq
      %v1022 = vshrl.u32 %v1021, 7
      %v1023 = vsub.s32 0, %v1022
      %v1024 = vrot.slane %v854, %v1023
      %v1025 = vlaneseq
      %v1026 = vshrl.u32 %v1025, 7
      %v1027 = vsub.s32 0, %v1026
      %v1028 = vrot.slane %v855, %v1027
      %v1029 = vlaneseq
      %v1030 = vshrl.u32 %v1029, 7
      %v1031 = vsub.s32 0, %v1030
      %v1032 = vrot.slane %v856, %v1031
      %v1033 = vlaneseq
      %v1034 = vshrl.u32 %v1033, 7
      %v1035 = vsub.s32 0, %v1034
      %v1036 = vrot.slane %v857, %v1035
      %v1037 = vlaneseq
      %v1038 = vshrl.u32 %v1037, 7
      %v1039 = vsub.s32 0, %v1038
      %v1040 = vrot.slane %v858, %v1039
      %v1041 = vlaneseq
      %v1042 = vshrl.u32 %v1041, 7
      %v1043 = vsub.s32 0, %v1042
      %v1044 = vrot.slane %v859, %v1043
      %v1045 = vlaneseq
      %v1046 = vshrl.u32 %v1045, 7
      %v1047 = vsub.s32 0, %v1046
      %v1048 = vrot.slane %v860, %v1047
      %v1049 = vlaneseq
      %v1050 = vshrl.u32 %v1049, 7
      %v1051 = vsub.s32 0, %v1050
      %v1052 = vrot.slane %v861, %v1051
      %v1053 = vlaneseq
      %v1054 = vshrl.u32 %v1053, 7
      %v1055 = vsub.s32 0, %v1054
      %v1056 = vrot.slane %v862, %v1055
      %v1057 = vlaneseq
      %v1058 = vshrl.u32 %v1057, 7
      %v1059 = vsub.s32 0, %v1058
      %v1060 = vrot.slane %v863, %v1059
      %v1061 = vlaneseq
      %v1062 = vshrl.u32 %v1061, 7
      %v1063 = vsub.s32 0, %v1062
      %v1064 = vrot.slane %v864, %v1063
      %v1065 = vlaneseq
      %v1066 = vshrl.u32 %v1065, 7
      %v1067 = vsub.s32 0, %v1066
      %v1068 = vrot.slane %v865, %v1067
      %v1069 = vlaneseq
      %v1070 = vshrl.u32 %v1069, 7
      %v1071 = vsub.s32 0, %v1070
      %v1072 = vrot.slane %v866, %v1071
      %v1073 = vlaneseq
      %v1074 = vshrl.u32 %v1073, 7
      %v1075 = vsub.s32 0, %v1074
      %v1076 = vrot.slane %v867, %v1075
      %v1077 = vlaneseq
      %v1078 = vshrl.u32 %v1077, 7
      %v1079 = vsub.s32 0, %v1078
      %v1080 = vrot.slane %v868, %v1079
      %v1081 = vlaneseq
      %v1082 = vshrl.u32 %v1081, 7
      %v1083 = vsub.s32 0, %v1082
      %v1084 = vrot.slane %v869, %v1083
      %v1085 = vlaneseq
      %v1086 = vshrl.u32 %v1085, 7
      %v1087 = vsub.s32 0, %v1086
      %v1088 = vrot.slane %v870, %v1087
      %v1089 = vlaneseq
      %v1090 = vshrl.u32 %v1089, 7
      %v1091 = vsub.s32 0, %v1090
      %v1092 = vrot.slane %v871, %v1091
      %v1093 = vlaneseq
      %v1094 = vshrl.u32 %v1093, 7
      %v1095 = vsub.s32 0, %v1094
      %v1096 = vrot.slane %v872, %v1095
      %v1097 = vlaneseq
      %v1098 = vshrl.u32 %v1097, 7
      %v1099 = vsub.s32 0, %v1098
      %v1100 = vrot.slane %v873, %v1099
      %v1101 = vlaneseq
      %v1102 = vshrl.u32 %v1101, 7
      %v1103 = vsub.s32 0, %v1102
      %v1104 = vrot.slane %v874, %v1103
      %v1105 = vlaneseq
      %v1106 = vshrl.u32 %v1105, 7
      %v1107 = vsub.s32 0, %v1106
      %v1108 = vrot.slane %v875, %v1107
      %v1109 = vlaneseq
      %v1110 = vshrl.u32 %v1109, 7
      %v1111 = vsub.s32 0, %v1110
      %v1112 = vrot.slane %v876, %v1111
      %v1113 = vlaneseq
      %v1114 = vshrl.u32 %v1113, 7
      %v1115 = vsub.s32 0, %v1114
      %v1116 = vrot.slane %v877, %v1115
      %v1117 = vlaneseq
      %v1118 = vshrl.u32 %v1117, 7
      %v1119 = vsub.s32 0, %v1118
      %v1120 = vrot.slane %v878, %v1119
      %v1121 = vlaneseq
      %v1122 = vshrl.u32 %v1121, 7
      %v1123 = vsub.s32 0, %v1122
      %v1124 = vrot.slane %v879, %v1123
      %v1125 = vlaneseq
      %v1126 = vshrl.u32 %v1125, 7
      %v1127 = vsub.s32 0, %v1126
      %v1128 = vrot.slane %v880, %v1127
      %v1129 = vlaneseq
      %v1130 = vshrl.u32 %v1129, 7
      %v1131 = vsub.s32 0, %v1130
      %v1132 = vrot.slane %v881, %v1131
      %v1133 = vlaneseq
      %v1134 = vshrl.u32 %v1133, 7
      %v1135 = vsub.s32 0, %v1134
      %v1136 = vrot.slane %v882, %v1135
      %v1137 = vlaneseq
      %v1138 = vshrl.u32 %v1137, 7
      %v1139 = vsub.s32 0, %v1138
      %v1140 = vrot.slane %v883, %v1139
      %v1141 = vlaneseq
      %v1142 = vshrl.u32 %v1141, 7
      %v1143 = vsub.s32 0, %v1142
      %v1144 = vrot.slane %v884, %v1143
      %v1145 = vlaneseq
      %v1146 = vshrl.u32 %v1145, 7
      %v1147 = vsub.s32 0, %v1146
      %v1148 = vrot.slane %v885, %v1147
      %v1149 = vlaneseq
      %v1150 = vshrl.u32 %v1149, 7
      %v1151 = vsub.s32 0, %v1150
      %v1152 = vrot.slane %v886, %v1151
      %v1153 = vlaneseq
      %v1154 = vshrl.u32 %v1153, 7
      %v1155 = vsub.s32 0, %v1154
      %v1156 = vrot.slane %v887, %v1155
      %v1157 = vlaneseq
      %v1158 = vshrl.u32 %v1157, 7
      %v1159 = vsub.s32 0, %v1158
      %v1160 = vrot.slane %v888, %v1159
      %v1161 = vlaneseq
      %v1162 = vshrl.u32 %v1161, 7
      %v1163 = vsub.s32 0, %v1162
      %v1164 = vrot.slane %v889, %v1163
      %v1165 = vlaneseq
      %v1166 = vshrl.u32 %v1165, 7
      %v1167 = vsub.s32 0, %v1166
      %v1168 = vrot.slane %v890, %v1167
      %v1169 = vlaneseq
      %v1170 = vshrl.u32 %v1169, 7
      %v1171 = vsub.s32 0, %v1170
      %v1172 = vrot.slane %v891, %v1171
      %v1173 = vlaneseq
      %v1174 = vshrl.u32 %v1173, 7
      %v1175 = vsub.s32 0, %v1174
      %v1176 = vrot.slane %v892, %v1175
      %v1177 = vlaneseq
      %v1178 = vshrl.u32 %v1177, 7
      %v1179 = vsub.s32 0, %v1178
      %v1180 = vrot.slane %v893, %v1179
      %v1181 = vlaneseq
      %v1182 = vshrl.u32 %v1181, 7
      %v1183 = vsub.s32 0, %v1182
      %v1184 = vrot.slane %v894, %v1183
      %v1185 = vlaneseq
      %v1186 = vshrl.u32 %v1185, 7
      %v1187 = vsub.s32 0, %v1186
      %v1188 = vrot.slane %v895, %v1187
      %v1189 = vlaneseq
      %v1190 = vshrl.u32 %v1189, 7
      %v1191 = vsub.s32 0, %v1190
      %v1192 = vrot.slane %v896, %v1191
      %v1193 = vlaneseq
      %v1194 = vshrl.u32 %v1193, 7
      %v1195 = vsub.s32 0, %v1194
      %v1196 = vrot.slane %v897, %v1195
      %v1197 = vlaneseq
      %v1198 = vshrl.u32 %v1197, 7
      %v1199 = vsub.s32 0, %v1198
      %v1200 = vrot.slane %v898, %v1199
      %v1201 = vlaneseq
      %v1202 = vshrl.u32 %v1201, 7
      %v1203 = vsub.s32 0, %v1202
      %v1204 = vrot.slane %v899, %v1203
      %v1205 = vlaneseq
      %v1206 = vshrl.u32 %v1205, 7
      %v1207 = vsub.s32 0, %v1206
      %v1208 = vrot.slane %v900, %v1207
      %v1209 = vlaneseq
      %v1210 = vshrl.u32 %v1209, 7
      %v1211 = vsub.s32 0, %v1210
      %v1212 = vrot.slane %v901, %v1211
      %v1213 = vlaneseq
      %v1214 = vshrl.u32 %v1213, 7
      %v1215 = vsub.s32 0, %v1214
      %v1216 = vrot.slane %v902, %v1215
      %v1217 = vlaneseq
      %v1218 = vshrl.u32 %v1217, 7
      %v1219 = vsub.s32 0, %v1218
      %v1220 = vrot.slane %v903, %v1219
      %v1221 = vlaneseq
      %v1222 = vshrl.u32 %v1221, 7
      %v1223 = vsub.s32 0, %v1222
      %v1224 = vrot.slane %v904, %v1223
      %vm1225 = vcmask 1041409
      %v1226 = vsel %vm1225, %v976, %v972
      %vm1227 = vcmask 1042434
      %v1228 = vsel %vm1227, %v980, %v1226
      %vm1229 = vcmask 1043459
      %v1230 = vsel %vm1229, %v984, %v1228
      %vm1231 = vcmask 1044484
      %v1232 = vsel %vm1231, %v988, %v1230
      %vm1233 = vcmask 1045509
      %v1234 = vsel %vm1233, %v992, %v1232
      %vm1235 = vcmask 1046534
      %v1236 = vsel %vm1235, %v996, %v1234
      %vm1237 = vcmask 1047559
      %v1238 = vsel %vm1237, %v1000, %v1236
      %v1239 = vsel %vm1225, %v1008, %v1004
      %v1240 = vsel %vm1227, %v1012, %v1239
      %v1241 = vsel %vm1229, %v1016, %v1240
      %v1242 = vsel %vm1231, %v1020, %v1241
      %v1243 = vsel %vm1233, %v1024, %v1242
      %v1244 = vsel %vm1235, %v1028, %v1243
      %v1245 = vsel %vm1237, %v1032, %v1244
      %v1246 = vsel %vm1225, %v1040, %v1036
      %v1247 = vsel %vm1227, %v1044, %v1246
      %v1248 = vsel %vm1229, %v1048, %v1247
      %v1249 = vsel %vm1231, %v1052, %v1248
      %v1250 = vsel %vm1233, %v1056, %v1249
      %v1251 = vsel %vm1235, %v1060, %v1250
      %v1252 = vsel %vm1237, %v1064, %v1251
      %v1253 = vsel %vm1225, %v1072, %v1068
      %v1254 = vsel %vm1227, %v1076, %v1253
      %v1255 = vsel %vm1229, %v1080, %v1254
      %v1256 = vsel %vm1231, %v1084, %v1255
      %v1257 = vsel %vm1233, %v1088, %v1256
      %v1258 = vsel %vm1235, %v1092, %v1257
      %v1259 = vsel %vm1237, %v1096, %v1258
      %v1260 = vsel %vm1225, %v1104, %v1100
      %v1261 = vsel %vm1227, %v1108, %v1260
      %v1262 = vsel %vm1229, %v1112, %v1261
      %v1263 = vsel %vm1231, %v1116, %v1262
      %v1264 = vsel %vm1233, %v1120, %v1263
      %v1265 = vsel %vm1235, %v1124, %v1264
      %v1266 = vsel %vm1237, %v1128, %v1265
      %v1267 = vsel %vm1225, %v1136, %v1132
      %v1268 = vsel %vm1227, %v1140, %v1267
      %v1269 = vsel %vm1229, %v1144, %v1268
      %v1270 = vsel %vm1231, %v1148, %v1269
      %v1271 = vsel %vm1233, %v1152, %v1270
      %v1272 = vsel %vm1235, %v1156, %v1271
      %v1273 = vsel %vm1237, %v1160, %v1272
      %v1274 = vsel %vm1225, %v1168, %v1164
      %v1275 = vsel %vm1227, %v1172, %v1274
      %v1276 = vsel %vm1229, %v1176, %v1275
      %v1277 = vsel %vm1231, %v1180, %v1276
      %v1278 = vsel %vm1233, %v1184, %v1277
      %v1279 = vsel %vm1235, %v1188, %v1278
      %v1280 = vsel %vm1237, %v1192, %v1279
      %v1281 = vsel %vm1225, %v1200, %v1196
      %v1282 = vsel %vm1227, %v1204, %v1281
      %v1283 = vsel %vm1229, %v1208, %v1282
      %v1284 = vsel %vm1231, %v1212, %v1283
      %v1285 = vsel %vm1233, %v1216, %v1284
      %v1286 = vsel %vm1235, %v1220, %v1285
      %v1287 = vsel %vm1237, %v1224, %v1286
      %vm1296 = vcmask 64512
      %1297 = vst.msk [vmem:[%s170] sm:$0xff] %vm1296, %v1238
      %1298 = vst.msk [vmem:[%s170 + $0x8] sm:$0xff] %vm1296, %v1245
      %1299 = vst.msk [vmem:[%s170 + $0x10] sm:$0xff] %vm1296, %v1252
      %1300 = vst.msk [vmem:[%s170 + $0x18] sm:$0xff] %vm1296, %v1259
      %1301 = vst.msk [vmem:[%s170 + $0x20] sm:$0xff] %vm1296, %v1266
      %1302 = vst.msk [vmem:[%s170 + $0x28] sm:$0xff] %vm1296, %v1273
      %1303 = vst.msk [vmem:[%s170 + $0x30] sm:$0xff] %vm1296, %v1280
      %1304 = vst.msk [vmem:[%s170 + $0x38] sm:$0xff] %vm1296, %v1287
      %p1305 = scmp.lt.s32.totalorder %s14, 1
      %s1306 = scalar_select %p1305, %s14, 1
      %s1307 = smul.addr %s1306, 8
      %s1308 = smul.addr %s1307, 8
      %s1309 = scalar_lea.vmem %s3, %s1308
      // Predicated region
      $region33: #{cnn_block_forward.3} parent=31 // pred_check
        %p1310 = pneg %p100
      $region34: #{cnn_block_forward.3} parent=31 // pred_check_branch
        %1312 = sbr.rel (%p1310) target = $region36
      $region35: #{cnn_block_forward.3} parent=31 // pred_region
        _
      $region36: #{cnn_block_forward.3} parent=31 // pred_fallthru
        _
    $region32: #{cnn_block_forward.3} parent=5 // pred_fallthru
      _
    %p1313 = scmp.le.s32.totalorder 2, %s9
    // Predicated region
    $region37: #{cnn_block_forward.3} parent=5 // pred_check
      %p1314 = pneg %p1313
    $region38: #{cnn_block_forward.3} parent=5 // pred_check_branch
      %1316 = sbr.rel (%p1314) target = $region40
    $region39: #{cnn_block_forward.3} parent=5 // pred_region
      %s1317 = ssub.s32 %s9, 2
      // Predicated region
      $region41: #{cnn_block_forward.3} parent=39 // pred_check
        %p1318 = pneg %p106
      $region42: #{cnn_block_forward.3} parent=39 // pred_check_branch
        %1320 = sbr.rel (%p1318) target = $region44
      $region43: #{cnn_block_forward.3} parent=39 // pred_region
        %p1321 = scmp.lt.s32.totalorder %s15, 1
        %s1322 = scalar_select %p1321, %s15, 1
        %s1323 = smul.addr %s1322, 8
        %s1324 = smul.addr %s1323, 8
        %s1325 = scalar_lea.vmem %s3, %s1324
      $region44: #{cnn_block_forward.3} parent=39 // pred_fallthru
        _
    $region40: #{cnn_block_forward.3} parent=5 // pred_fallthru
      _
  $region6: #{cnn_block_forward.3} parent=0 // loop_footer
    %s13 = sadd.s32 1, %s9
  $region7: #{cnn_block_forward.3} parent=0 // loop_footer_branch
    %8 = sbr.rel target = $region3
  $region8: #{cnn_block_forward.3} parent=0 // loop_exit
    _

// kernel: cnn_block_forward.2
$region0: #{cnn_block_forward.2}
  #allocation0 [shape = 'u32[]', space=smem, size = 0x4, offset = 0x4, fixed_abs, tag = 'smem constant byte address 0x4 - core index']
  #allocation1 [shape = 'u32[144,128]{1,0:T(1,128)}', space=vmem, size = 0x12000, scoped, tag = 'internal scratch']
  #allocation2 [shape = 'bf16[256,36]{1,0:T(16,128)(2,1)}', space=vmem, size = 0x10000, scoped, tag = 'scratch operand']
  %s0 = inlined_call_operand.vmem [shape: f32[2,18,18,4], index: 0, kind: input, shape index: {}]
  %s1 = inlined_call_operand.vmem [shape: bf16[36,8], index: 1, kind: input, shape index: {}]
  %s2 = inlined_call_operand.vmem [shape: f32[1,8], index: 2, kind: input, shape index: {}]
  %s3 = inlined_call_operand.vmem [shape: f32[2,256,8], index: 3, kind: output, shape index: {0}]
  %s4 = inlined_call_operand.vmem [shape: f32[2,2,8], index: 4, kind: output, shape index: {1}]
  %5 = xla_tuple %s3, %s4
  %s6 = sld [smem:[#allocation0]]
  $region53: #{cnn_block_forward.2} parent=0
    _
  %s8 = ssub.s32 1, %s6
  %s9 = scalar_select 0, %s8, %s6
  loop: start=0, step=1, limit=4
  $region2: #{cnn_block_forward.2} parent=0 // loop_pre_header
    _
  $region3: #{cnn_block_forward.2} parent=0 // loop_header
    %s11 = sphi 0, %s15
    %p12 = scmp.ge.s32.totalorder %s11, 4
    %s21 = sphi 0, %s23
    %s24 = sphi 0, %s21
    %s25 = sphi 0, %s24
    %s41 = sphi 0, %s25
    %s45 = sphi 0, %s45
    %s47 = sphi 0, %s45
    %s48 = sphi 0, %s47
    %s62 = sphi 0, %s48
    %s66 = sphi 0, %s66
    %s68 = sphi 0, %s66
    %s69 = sphi 0, %s68
    %s83 = sphi 0, %s69
    %s89 = sphi 0, %s91
    %s92 = sphi 0, %s89
    %s93 = sphi 0, %s92
    %s109 = sphi 0, %s93
    %s115 = sphi 0, %s117
    %s118 = sphi 0, %s115
    %s119 = sphi 0, %s118
    %s135 = sphi 0, %s119
  $region4: #{cnn_block_forward.2} parent=0 // loop_header_branch
    %14 = sbr.rel (%p12) target = $region8
  $region5: #{cnn_block_forward.2} parent=0 // loop_body
    %s16 = ssub.s32 %s11, 1
    %s17 = ssub.s32 %s11, 2
    %s18 = sadd.s32 %s11, 1
    %s19 = ssub.s32 %s11, %s18
    %p20 = scmp.eq.s32.totalorder %s19, 0
    %s22 = sadd.s32 %s21, 1
    %s23 = scalar_select %p20, %s21, %s22
    %p26 = pneg %p20
    %p27 = scmp.eq.s32.totalorder %s11, 1
    %p28 = por %p26, %p27
    %p29 = scmp.ne.s32.totalorder %s21, %s24
    %p30 = scmp.eq.s32.totalorder %s11, 0
    %p31 = por %p29, %p30
    %p32 = scmp.ne.s32.totalorder %s21, %s24
    %p33 = scmp.eq.s32.totalorder %s16, 1
    %p34 = por %p32, %p33
    %p35 = scmp.ne.s32.totalorder %s24, %s25
    %p36 = scmp.eq.s32.totalorder %s16, 0
    %p37 = por %p35, %p36
    %p38 = scmp.ne.s32.totalorder %s24, %s25
    %p39 = scmp.eq.s32.totalorder %s17, 1
    %p40 = por %p38, %p39
    %p42 = scmp.ne.s32.totalorder %s25, %s41
    %p43 = scmp.eq.s32.totalorder %s17, 0
    %p44 = por %p42, %p43
    %s46 = sadd.s32 %s45, 1
    %p49 = scmp.eq.s32.totalorder %s11, 1
    %p50 = scmp.ne.s32.totalorder %s45, %s47
    %p51 = scmp.eq.s32.totalorder %s11, 0
    %p52 = por %p50, %p51
    %p53 = scmp.ne.s32.totalorder %s45, %s47
    %p54 = scmp.eq.s32.totalorder %s16, 1
    %p55 = por %p53, %p54
    %p56 = scmp.ne.s32.totalorder %s47, %s48
    %p57 = scmp.eq.s32.totalorder %s16, 0
    %p58 = por %p56, %p57
    %p59 = scmp.ne.s32.totalorder %s47, %s48
    %p60 = scmp.eq.s32.totalorder %s17, 1
    %p61 = por %p59, %p60
    %p63 = scmp.ne.s32.totalorder %s48, %s62
    %p64 = scmp.eq.s32.totalorder %s17, 0
    %p65 = por %p63, %p64
    %s67 = sadd.s32 %s66, 1
    %p70 = scmp.eq.s32.totalorder %s11, 1
    %p71 = scmp.ne.s32.totalorder %s66, %s68
    %p72 = scmp.eq.s32.totalorder %s11, 0
    %p73 = por %p71, %p72
    %p74 = scmp.ne.s32.totalorder %s66, %s68
    %p75 = scmp.eq.s32.totalorder %s16, 1
    %p76 = por %p74, %p75
    %p77 = scmp.ne.s32.totalorder %s68, %s69
    %p78 = scmp.eq.s32.totalorder %s16, 0
    %p79 = por %p77, %p78
    %p80 = scmp.ne.s32.totalorder %s68, %s69
    %p81 = scmp.eq.s32.totalorder %s17, 1
    %p82 = por %p80, %p81
    %p84 = scmp.ne.s32.totalorder %s69, %s83
    %p85 = scmp.eq.s32.totalorder %s17, 0
    %p86 = por %p84, %p85
    %s87 = ssub.s32 %s11, %s18
    %p88 = scmp.eq.s32.totalorder %s87, 0
    %s90 = sadd.s32 %s89, 1
    %s91 = scalar_select %p88, %s89, %s90
    %p94 = pneg %p88
    %p95 = scmp.eq.s32.totalorder %s11, 1
    %p96 = por %p94, %p95
    %p97 = scmp.ne.s32.totalorder %s89, %s92
    %p98 = scmp.eq.s32.totalorder %s11, 0
    %p99 = por %p97, %p98
    %p100 = scmp.ne.s32.totalorder %s89, %s92
    %p101 = scmp.eq.s32.totalorder %s16, 1
    %p102 = por %p100, %p101
    %p103 = scmp.ne.s32.totalorder %s92, %s93
    %p104 = scmp.eq.s32.totalorder %s16, 0
    %p105 = por %p103, %p104
    %p106 = scmp.ne.s32.totalorder %s92, %s93
    %p107 = scmp.eq.s32.totalorder %s17, 1
    %p108 = por %p106, %p107
    %p110 = scmp.ne.s32.totalorder %s93, %s109
    %p111 = scmp.eq.s32.totalorder %s17, 0
    %p112 = por %p110, %p111
    %s113 = ssub.s32 %s11, %s18
    %p114 = scmp.eq.s32.totalorder %s113, 0
    %s116 = sadd.s32 %s115, 1
    %s117 = scalar_select %p114, %s115, %s116
    %p120 = pneg %p114
    %p121 = scmp.eq.s32.totalorder %s11, 1
    %p122 = por %p120, %p121
    %p123 = scmp.ne.s32.totalorder %s115, %s118
    %p124 = scmp.eq.s32.totalorder %s11, 0
    %p125 = por %p123, %p124
    %p126 = scmp.ne.s32.totalorder %s115, %s118
    %p127 = scmp.eq.s32.totalorder %s16, 1
    %p128 = por %p126, %p127
    %p129 = scmp.ne.s32.totalorder %s118, %s119
    %p130 = scmp.eq.s32.totalorder %s16, 0
    %p131 = por %p129, %p130
    %p132 = scmp.ne.s32.totalorder %s118, %s119
    %p133 = scmp.eq.s32.totalorder %s17, 1
    %p134 = por %p132, %p133
    %p136 = scmp.ne.s32.totalorder %s119, %s135
    %p137 = scmp.eq.s32.totalorder %s17, 0
    %p138 = por %p136, %p137
    %p139 = scmp.le.s32.totalorder 1, %s11
    %p140 = scmp.lt.s32.totalorder %s11, 3
    %p141 = pnand %p139, %p140
    %p142 = pneg %p141
    // Predicated region
    $region9: #{cnn_block_forward.2} parent=5 // pred_check
      _
    $region10: #{cnn_block_forward.2} parent=5 // pred_check_branch
      %144 = sbr.rel (%p141) target = $region12
    $region11: #{cnn_block_forward.2} parent=5 // pred_region
      %s145 = ssub.s32 %s11, 1
      // Predicated region
      $region13: #{cnn_block_forward.2} parent=11 // pred_check
        %p146 = pneg %p58
      $region14: #{cnn_block_forward.2} parent=11 // pred_check_branch
        %148 = sbr.rel (%p146) target = $region16
      $region15: #{cnn_block_forward.2} parent=11 // pred_region
        _
      $region16: #{cnn_block_forward.2} parent=11 // pred_fallthru
        _
      // Predicated region
      $region17: #{cnn_block_forward.2} parent=11 // pred_check
        %p149 = pneg %p79
      $region18: #{cnn_block_forward.2} parent=11 // pred_check_branch
        %151 = sbr.rel (%p149) target = $region20
      $region19: #{cnn_block_forward.2} parent=11 // pred_region
        _
      $region20: #{cnn_block_forward.2} parent=11 // pred_fallthru
        _
    $region12: #{cnn_block_forward.2} parent=5 // pred_fallthru
      _
    %p152 = scmp.lt.s32.totalorder %s11, 2
    // Predicated region
    $region21: #{cnn_block_forward.2} parent=5 // pred_check
      %p153 = pneg %p152
    $region22: #{cnn_block_forward.2} parent=5 // pred_check_branch
      %155 = sbr.rel (%p153) target = $region24
    $region23: #{cnn_block_forward.2} parent=5 // pred_region
      // Predicated region
      $region25: #{cnn_block_forward.2} parent=23 // pred_check
        %p156 = pneg %p31
      $region26: #{cnn_block_forward.2} parent=23 // pred_check_branch
        %158 = sbr.rel (%p156) target = $region28
      $region27: #{cnn_block_forward.2} parent=23 // pred_region
        %p159 = scmp.lt.s32.totalorder %s11, 1
        %s160 = scalar_select %p159, %s11, 1
        %s161 = smul.addr %s160, 54
        %s162 = smul.addr %s161, 8
        %s163 = scalar_lea.vmem %s0, %s162
      $region28: #{cnn_block_forward.2} parent=23 // pred_fallthru
        _
    $region24: #{cnn_block_forward.2} parent=5 // pred_fallthru
      _
    %p164 = scmp.le.s32.totalorder 1, %s11
    %p165 = scmp.lt.s32.totalorder %s11, 3
    %p166 = pnand %p164, %p165
    %p167 = pneg %p166
    // Predicated region
    $region29: #{cnn_block_forward.2} parent=5 // pred_check
      _
    $region30: #{cnn_block_forward.2} parent=5 // pred_check_branch
      %169 = sbr.rel (%p166) target = $region32
    $region31: #{cnn_block_forward.2} parent=5 // pred_region
      %s170 = ssub.s32 %s11, 1
      %p171 = scmp.lt.s32.totalorder %s16, 1
      %s172 = scalar_select %p171, %s16, 1
      %s173 = smul.addr %s172, 54
      %s174 = smul.addr %s173, 8
      %s175 = scalar_lea.vmem %s0, %s174
      %p176 = pneg %p37
      %p177 = pneg %p34
      %p178 = pneg %p58
      %p179 = pneg %p55
      %p180 = pneg %p79
      %p181 = pneg %p76
      %p182 = pneg %p105
      %p183 = pneg %p102
      %p184 = scmp.lt.s32.totalorder %s16, 1
      %s185 = scalar_select %p184, %s16, 1
      %s186 = smul.addr %s185, 32
      %s187 = smul.addr %s186, 8
      %s188 = scalar_lea.vmem %s3, %s187
      %p189 = pneg %p131
      %p190 = pneg %p128
      %p191 = scmp.lt.s32.totalorder %s16, 1
      %s192 = scalar_select %p191, %s16, 1
      %s193 = smul.addr %s192, 2
      %s194 = scalar_lea.vmem %s4, %s193
      %p195 = scmp.lt.s32.totalorder %s16, 1
      %s196 = scalar_select %p195, %s16, 1
      %s197 = smul.addr %s196, 54
      %s198 = smul.addr %s197, 8
      %s199 = scalar_lea.vmem %s0, %s198
      %p200 = scmp.lt.s32.totalorder %s16, 1
      %s201 = scalar_select %p200, %s16, 1
      %s202 = smul.addr %s201, 32
      %s203 = smul.addr %s202, 8
      %s204 = scalar_lea.vmem %s3, %s203
      %p205 = scmp.lt.s32.totalorder %s16, 1
      %s206 = scalar_select %p205, %s16, 1
      %s207 = smul.addr %s206, 2
      %s208 = scalar_lea.vmem %s4, %s207
      %v210 = vld [vmem:[%s199] sm:$0xff]
      %v211 = vld [vmem:[%s199 + $0x8] sm:$0xff]
      %v212 = vld [vmem:[%s199 + $0x18] sm:$0xff]
      %v213 = vld [vmem:[%s199 + $0x20] sm:$0xff]
      %v214 = vld [vmem:[%s199 + $0x30] sm:$0xff]
      %v215 = vld [vmem:[%s199 + $0x38] sm:$0xff]
      %v216 = vld [vmem:[%s199 + $0x48] sm:$0xff]
      %v217 = vld [vmem:[%s199 + $0x50] sm:$0xff]
      %v218 = vld [vmem:[%s199 + $0x60] sm:$0xff]
      %v219 = vld [vmem:[%s199 + $0x68] sm:$0xff]
      %v220 = vld [vmem:[%s199 + $0x78] sm:$0xff]
      %v221 = vld [vmem:[%s199 + $0x80] sm:$0xff]
      %v222 = vld [vmem:[%s199 + $0x90] sm:$0xff]
      %v223 = vld [vmem:[%s199 + $0x98] sm:$0xff]
      %v224 = vld [vmem:[%s199 + $0xa8] sm:$0xff]
      %v225 = vld [vmem:[%s199 + $0xb0] sm:$0xff]
      %v226 = vld [vmem:[%s199 + $0xc0] sm:$0xff]
      %v227 = vld [vmem:[%s199 + $0xc8] sm:$0xff]
      %v228 = vld [vmem:[%s199 + $0xd8] sm:$0xff]
      %v229 = vld [vmem:[%s199 + $0xe0] sm:$0xff]
      %v230 = vld [vmem:[%s199 + $0xf0] sm:$0xff]
      %v231 = vld [vmem:[%s199 + $0xf8] sm:$0xff]
      %v232 = vld [vmem:[%s199 + $0x108] sm:$0xff]
      %v233 = vld [vmem:[%s199 + $0x110] sm:$0xff]
      %v234 = vld [vmem:[%s199 + $0x120] sm:$0xff]
      %v235 = vld [vmem:[%s199 + $0x128] sm:$0xff]
      %v236 = vld [vmem:[%s199 + $0x138] sm:$0xff]
      %v237 = vld [vmem:[%s199 + $0x140] sm:$0xff]
      %v238 = vld [vmem:[%s199 + $0x150] sm:$0xff]
      %v239 = vld [vmem:[%s199 + $0x158] sm:$0xff]
      %v240 = vld [vmem:[%s199 + $0x168] sm:$0xff]
      %v241 = vld [vmem:[%s199 + $0x170] sm:$0xff]
      %v242 = vpack.c.bf16 %v211, %v210
      %v243 = vpack.c.bf16 %v213, %v212
      %v244 = vpack.c.bf16 %v215, %v214
      %v245 = vpack.c.bf16 %v217, %v216
      %v246 = vpack.c.bf16 %v219, %v218
      %v247 = vpack.c.bf16 %v221, %v220
      %v248 = vpack.c.bf16 %v223, %v222
      %v249 = vpack.c.bf16 %v225, %v224
      %v250 = vpack.c.bf16 %v227, %v226
      %v251 = vpack.c.bf16 %v229, %v228
      %v252 = vpack.c.bf16 %v231, %v230
      %v253 = vpack.c.bf16 %v233, %v232
      %v254 = vpack.c.bf16 %v235, %v234
      %v255 = vpack.c.bf16 %v237, %v236
      %v256 = vpack.c.bf16 %v239, %v238
      %v257 = vpack.c.bf16 %v241, %v240
      %vm258 = vcmask 31744
      %259 = vst.msk [vmem:[#allocation2] sm:$0xff] %vm258, %v242
      %260 = vst.msk [vmem:[#allocation2 + $0x8] sm:$0xff] %vm258, %v243
      %261 = vst.msk [vmem:[#allocation2 + $0x10] sm:$0xff] %vm258, %v244
      %262 = vst.msk [vmem:[#allocation2 + $0x18] sm:$0xff] %vm258, %v245
      %263 = vst.msk [vmem:[#allocation2 + $0x20] sm:$0xff] %vm258, %v246
      %264 = vst.msk [vmem:[#allocation2 + $0x28] sm:$0xff] %vm258, %v247
      %265 = vst.msk [vmem:[#allocation2 + $0x30] sm:$0xff] %vm258, %v248
      %266 = vst.msk [vmem:[#allocation2 + $0x38] sm:$0xff] %vm258, %v249
      %267 = vst.msk [vmem:[#allocation2 + $0x40] sm:$0xff] %vm258, %v250
      %268 = vst.msk [vmem:[#allocation2 + $0x48] sm:$0xff] %vm258, %v251
      %269 = vst.msk [vmem:[#allocation2 + $0x50] sm:$0xff] %vm258, %v252
      %270 = vst.msk [vmem:[#allocation2 + $0x58] sm:$0xff] %vm258, %v253
      %271 = vst.msk [vmem:[#allocation2 + $0x60] sm:$0xff] %vm258, %v254
      %272 = vst.msk [vmem:[#allocation2 + $0x68] sm:$0xff] %vm258, %v255
      %273 = vst.msk [vmem:[#allocation2 + $0x70] sm:$0xff] %vm258, %v256
      %274 = vst.msk [vmem:[#allocation2 + $0x78] sm:$0xff] %vm258, %v257
      %v275 = vld [vmem:[%s199 + $0x1] sm:$0xff]
      %v276 = vld [vmem:[%s199 + $0x9] sm:$0xff]
      %v277 = vld [vmem:[%s199 + $0x19] sm:$0xff]
      %v278 = vld [vmem:[%s199 + $0x21] sm:$0xff]
      %v279 = vld [vmem:[%s199 + $0x31] sm:$0xff]
      %v280 = vld [vmem:[%s199 + $0x39] sm:$0xff]
      %v281 = vld [vmem:[%s199 + $0x49] sm:$0xff]
      %v282 = vld [vmem:[%s199 + $0x51] sm:$0xff]
      %v283 = vld [vmem:[%s199 + $0x61] sm:$0xff]
      %v284 = vld [vmem:[%s199 + $0x69] sm:$0xff]
      %v285 = vld [vmem:[%s199 + $0x79] sm:$0xff]
      %v286 = vld [vmem:[%s199 + $0x81] sm:$0xff]
      %v287 = vld [vmem:[%s199 + $0x91] sm:$0xff]
      %v288 = vld [vmem:[%s199 + $0x99] sm:$0xff]
      %v289 = vld [vmem:[%s199 + $0xa9] sm:$0xff]
      %v290 = vld [vmem:[%s199 + $0xb1] sm:$0xff]
      %v291 = vld [vmem:[%s199 + $0xc1] sm:$0xff]
      %v292 = vld [vmem:[%s199 + $0xc9] sm:$0xff]
      %v293 = vld [vmem:[%s199 + $0xd9] sm:$0xff]
      %v294 = vld [vmem:[%s199 + $0xe1] sm:$0xff]
      %v295 = vld [vmem:[%s199 + $0xf1] sm:$0xff]
      %v296 = vld [vmem:[%s199 + $0xf9] sm:$0xff]
      %v297 = vld [vmem:[%s199 + $0x109] sm:$0xff]
      %v298 = vld [vmem:[%s199 + $0x111] sm:$0xff]
      %v299 = vld [vmem:[%s199 + $0x121] sm:$0xff]
      %v300 = vld [vmem:[%s199 + $0x129] sm:$0xff]
      %v301 = vld [vmem:[%s199 + $0x139] sm:$0xff]
      %v302 = vld [vmem:[%s199 + $0x141] sm:$0xff]
      %v303 = vld [vmem:[%s199 + $0x151] sm:$0xff]
      %v304 = vld [vmem:[%s199 + $0x159] sm:$0xff]
      %v305 = vld [vmem:[%s199 + $0x169] sm:$0xff]
      %v306 = vld [vmem:[%s199 + $0x171] sm:$0xff]
      %v307 = vpack.c.bf16 %v276, %v275
      %v308 = vpack.c.bf16 %v278, %v277
      %v309 = vpack.c.bf16 %v280, %v279
      %v310 = vpack.c.bf16 %v282, %v281
      %v311 = vpack.c.bf16 %v284, %v283
      %v312 = vpack.c.bf16 %v286, %v285
      %v313 = vpack.c.bf16 %v288, %v287
      %v314 = vpack.c.bf16 %v290, %v289
      %v315 = vpack.c.bf16 %v292, %v291
      %v316 = vpack.c.bf16 %v294, %v293
      %v317 = vpack.c.bf16 %v296, %v295
      %v318 = vpack.c.bf16 %v298, %v297
      %v319 = vpack.c.bf16 %v300, %v299
      %v320 = vpack.c.bf16 %v302, %v301
      %v321 = vpack.c.bf16 %v304, %v303
      %v322 = vpack.c.bf16 %v306, %v305
      %339 = vrot.lane.b32.xlu0 %v307, 4
      %v340 = vpop.permute.xlu0 %339
      %341 = vrot.lane.b32.xlu0 %v308, 4
      %v342 = vpop.permute.xlu0 %341
      %343 = vrot.lane.b32.xlu0 %v309, 4
      %v344 = vpop.permute.xlu0 %343
      %345 = vrot.lane.b32.xlu0 %v310, 4
      %v346 = vpop.permute.xlu0 %345
      %347 = vrot.lane.b32.xlu0 %v311, 4
      %v348 = vpop.permute.xlu0 %347
      %349 = vrot.lane.b32.xlu0 %v312, 4
      %v350 = vpop.permute.xlu0 %349
      %351 = vrot.lane.b32.xlu0 %v313, 4
      %v352 = vpop.permute.xlu0 %351
      %353 = vrot.lane.b32.xlu0 %v314, 4
      %v354 = vpop.permute.xlu0 %353
      %355 = vrot.lane.b32.xlu0 %v315, 4
      %v356 = vpop.permute.xlu0 %355
      %357 = vrot.lane.b32.xlu0 %v316, 4
      %v358 = vpop.permute.xlu0 %357
      %359 = vrot.lane.b32.xlu0 %v317, 4
      %v360 = vpop.permute.xlu0 %359
      %361 = vrot.lane.b32.xlu0 %v318, 4
      %v362 = vpop.permute.xlu0 %361
      %363 = vrot.lane.b32.xlu0 %v319, 4
      %v364 = vpop.permute.xlu0 %363
      %365 = vrot.lane.b32.xlu0 %v320, 4
      %v366 = vpop.permute.xlu0 %365
      %367 = vrot.lane.b32.xlu0 %v321, 4
      %v368 = vpop.permute.xlu0 %367
      %369 = vrot.lane.b32.xlu0 %v322, 4
      %v370 = vpop.permute.xlu0 %369
      %vm387 = vcmask 64544
      %388 = vst.msk [vmem:[#allocation2] sm:$0xff] %vm387, %v340
      %389 = vst.msk [vmem:[#allocation2 + $0x8] sm:$0xff] %vm387, %v342
      %390 = vst.msk [vmem:[#allocation2 + $0x10] sm:$0xff] %vm387, %v344
      %391 = vst.msk [vmem:[#allocation2 + $0x18] sm:$0xff] %vm387, %v346
      %392 = vst.msk [vmem:[#allocation2 + $0x20] sm:$0xff] %vm387, %v348
      %393 = vst.msk [vmem:[#allocation2 + $0x28] sm:$0xff] %vm387, %v350
      %394 = vst.msk [vmem:[#allocation2 + $0x30] sm:$0xff] %vm387, %v352
      %395 = vst.msk [vmem:[#allocation2 + $0x38] sm:$0xff] %vm387, %v354
      %396 = vst.msk [vmem:[#allocation2 + $0x40] sm:$0xff] %vm387, %v356
      %397 = vst.msk [vmem:[#allocation2 + $0x48] sm:$0xff] %vm387, %v358
      %398 = vst.msk [vmem:[#allocation2 + $0x50] sm:$0xff] %vm387, %v360
      %399 = vst.msk [vmem:[#allocation2 + $0x58] sm:$0xff] %vm387, %v362
      %400 = vst.msk [vmem:[#allocation2 + $0x60] sm:$0xff] %vm387, %v364
      %401 = vst.msk [vmem:[#allocation2 + $0x68] sm:$0xff] %vm387, %v366
      %402 = vst.msk [vmem:[#allocation2 + $0x70] sm:$0xff] %vm387, %v368
      %403 = vst.msk [vmem:[#allocation2 + $0x78] sm:$0xff] %vm387, %v370
      %v404 = vld [vmem:[%s199 + $0x2] sm:$0xff]
      %v405 = vld [vmem:[%s199 + $0xa] sm:$0xff]
      %v406 = vld [vmem:[%s199 + $0x1a] sm:$0xff]
      %v407 = vld [vmem:[%s199 + $0x22] sm:$0xff]
      %v408 = vld [vmem:[%s199 + $0x32] sm:$0xff]
      %v409 = vld [vmem:[%s199 + $0x3a] sm:$0xff]
      %v410 = vld [vmem:[%s199 + $0x4a] sm:$0xff]
      %v411 = vld [vmem:[%s199 + $0x52] sm:$0xff]
      %v412 = vld [vmem:[%s199 + $0x62] sm:$0xff]
      %v413 = vld [vmem:[%s199 + $0x6a] sm:$0xff]
      %v414 = vld [vmem:[%s199 + $0x7a] sm:$0xff]
      %v415 = vld [vmem:[%s199 + $0x82] sm:$0xff]
      %v416 = vld [vmem:[%s199 + $0x92] sm:$0xff]
      %v417 = vld [vmem:[%s199 + $0x9a] sm:$0xff]
      %v418 = vld [vmem:[%s199 + $0xaa] sm:$0xff]
      %v419 = vld [vmem:[%s199 + $0xb2] sm:$0xff]
      %v420 = vld [vmem:[%s199 + $0xc2] sm:$0xff]
      %v421 = vld [vmem:[%s199 + $0xca] sm:$0xff]
      %v422 = vld [vmem:[%s199 + $0xda] sm:$0xff]
      %v423 = vld [vmem:[%s199 + $0xe2] sm:$0xff]
      %v424 = vld [vmem:[%s199 + $0xf2] sm:$0xff]
      %v425 = vld [vmem:[%s199 + $0xfa] sm:$0xff]
      %v426 = vld [vmem:[%s199 + $0x10a] sm:$0xff]
      %v427 = vld [vmem:[%s199 + $0x112] sm:$0xff]
      %v428 = vld [vmem:[%s199 + $0x122] sm:$0xff]
      %v429 = vld [vmem:[%s199 + $0x12a] sm:$0xff]
      %v430 = vld [vmem:[%s199 + $0x13a] sm:$0xff]
      %v431 = vld [vmem:[%s199 + $0x142] sm:$0xff]
      %v432 = vld [vmem:[%s199 + $0x152] sm:$0xff]
      %v433 = vld [vmem:[%s199 + $0x15a] sm:$0xff]
      %v434 = vld [vmem:[%s199 + $0x16a] sm:$0xff]
      %v435 = vld [vmem:[%s199 + $0x172] sm:$0xff]
      %v436 = vpack.c.bf16 %v405, %v404
      %v437 = vpack.c.bf16 %v407, %v406
      %v438 = vpack.c.bf16 %v409, %v408
      %v439 = vpack.c.bf16 %v411, %v410
      %v440 = vpack.c.bf16 %v413, %v412
      %v441 = vpack.c.bf16 %v415, %v414
      %v442 = vpack.c.bf16 %v417, %v416
      %v443 = vpack.c.bf16 %v419, %v418
      %v444 = vpack.c.bf16 %v421, %v420
      %v445 = vpack.c.bf16 %v423, %v422
      %v446 = vpack.c.bf16 %v425, %v424
      %v447 = vpack.c.bf16 %v427, %v426
      %v448 = vpack.c.bf16 %v429, %v428
      %v449 = vpack.c.bf16 %v431, %v430
      %v450 = vpack.c.bf16 %v433, %v432
      %v451 = vpack.c.bf16 %v435, %v434
      %468 = vrot.lane.b32.xlu0 %v436, 8
      %v469 = vpop.permute.xlu0 %468
      %470 = vrot.lane.b32.xlu0 %v437, 8
      %v471 = vpop.permute.xlu0 %470
      %472 = vrot.lane.b32.xlu0 %v438, 8
      %v473 = vpop.permute.xlu0 %472
      %474 = vrot.lane.b32.xlu0 %v439, 8
      %v475 = vpop.permute.xlu0 %474
      %476 = vrot.lane.b32.xlu0 %v440, 8
      %v477 = vpop.permute.xlu0 %476
      %478 = vrot.lane.b32.xlu0 %v441, 8
      %v479 = vpop.permute.xlu0 %478
      %480 = vrot.lane.b32.xlu0 %v442, 8
      %v481 = vpop.permute.xlu0 %480
      %482 = vrot.lane.b32.xlu0 %v443, 8
      %v483 = vpop.permute.xlu0 %482
      %484 = vrot.lane.b32.xlu0 %v444, 8
      %v485 = vpop.permute.xlu0 %484
      %486 = vrot.lane.b32.xlu0 %v445, 8
      %v487 = vpop.permute.xlu0 %486
      %488 = vrot.lane.b32.xlu0 %v446, 8
      %v489 = vpop.permute.xlu0 %488
      %490 = vrot.lane.b32.xlu0 %v447, 8
      %v491 = vpop.permute.xlu0 %490
      %492 = vrot.lane.b32.xlu0 %v448, 8
      %v493 = vpop.permute.xlu0 %492
      %494 = vrot.lane.b32.xlu0 %v449, 8
      %v495 = vpop.permute.xlu0 %494
      %496 = vrot.lane.b32.xlu0 %v450, 8
      %v497 = vpop.permute.xlu0 %496
      %498 = vrot.lane.b32.xlu0 %v451, 8
      %v499 = vpop.permute.xlu0 %498
      %vm516 = vcmask 97344
      %517 = vst.msk [vmem:[#allocation2] sm:$0xff] %vm516, %v469
      %518 = vst.msk [vmem:[#allocation2 + $0x8] sm:$0xff] %vm516, %v471
      %519 = vst.msk [vmem:[#allocation2 + $0x10] sm:$0xff] %vm516, %v473
      %520 = vst.msk [vmem:[#allocation2 + $0x18] sm:$0xff] %vm516, %v475
      %521 = vst.msk [vmem:[#allocation2 + $0x20] sm:$0xff] %vm516, %v477
      %522 = vst.msk [vmem:[#allocation2 + $0x28] sm:$0xff] %vm516, %v479
      %523 = vst.msk [vmem:[#allocation2 + $0x30] sm:$0xff] %vm516, %v481
      %524 = vst.msk [vmem:[#allocation2 + $0x38] sm:$0xff] %vm516, %v483
      %525 = vst.msk [vmem:[#allocation2 + $0x40] sm:$0xff] %vm516, %v485
      %526 = vst.msk [vmem:[#allocation2 + $0x48] sm:$0xff] %vm516, %v487
      %527 = vst.msk [vmem:[#allocation2 + $0x50] sm:$0xff] %vm516, %v489
      %528 = vst.msk [vmem:[#allocation2 + $0x58] sm:$0xff] %vm516, %v491
      %529 = vst.msk [vmem:[#allocation2 + $0x60] sm:$0xff] %vm516, %v493
      %530 = vst.msk [vmem:[#allocation2 + $0x68] sm:$0xff] %vm516, %v495
      %531 = vst.msk [vmem:[#allocation2 + $0x70] sm:$0xff] %vm516, %v497
      %532 = vst.msk [vmem:[#allocation2 + $0x78] sm:$0xff] %vm516, %v499
      %s533 = scalar_lea.vmem %s199, 24
      %v534 = vld [vmem:[%s533] sm:$0xff]
      %v535 = vld [vmem:[%s533 + $0x8] sm:$0xff]
      %v536 = vld [vmem:[%s533 + $0x18] sm:$0xff]
      %v537 = vld [vmem:[%s533 + $0x20] sm:$0xff]
      %v538 = vld [vmem:[%s533 + $0x30] sm:$0xff]
      %v539 = vld [vmem:[%s533 + $0x38] sm:$0xff]
      %v540 = vld [vmem:[%s533 + $0x48] sm:$0xff]
      %v541 = vld [vmem:[%s533 + $0x50] sm:$0xff]
      %v542 = vld [vmem:[%s533 + $0x60] sm:$0xff]
      %v543 = vld [vmem:[%s533 + $0x68] sm:$0xff]
      %v544 = vld [vmem:[%s533 + $0x78] sm:$0xff]
      %v545 = vld [vmem:[%s533 + $0x80] sm:$0xff]
      %v546 = vld [vmem:[%s533 + $0x90] sm:$0xff]
      %v547 = vld [vmem:[%s533 + $0x98] sm:$0xff]
      %v548 = vld [vmem:[%s533 + $0xa8] sm:$0xff]
      %v549 = vld [vmem:[%s533 + $0xb0] sm:$0xff]
      %v550 = vld [vmem:[%s533 + $0xc0] sm:$0xff]
      %v551 = vld [vmem:[%s533 + $0xc8] sm:$0xff]
      %v552 = vld [vmem:[%s533 + $0xd8] sm:$0xff]
      %v553 = vld [vmem:[%s533 + $0xe0] sm:$0xff]
      %v554 = vld [vmem:[%s533 + $0xf0] sm:$0xff]
      %v555 = vld [vmem:[%s533 + $0xf8] sm:$0xff]
      %v556 = vld [vmem:[%s533 + $0x108] sm:$0xff]
      %v557 = vld [vmem:[%s533 + $0x110] sm:$0xff]
      %v558 = vld [vmem:[%s533 + $0x120] sm:$0xff]
      %v559 = vld [vmem:[%s533 + $0x128] sm:$0xff]
      %v560 = vld [vmem:[%s533 + $0x138] sm:$0xff]
      %v561 = vld [vmem:[%s533 + $0x140] sm:$0xff]
      %v562 = vld [vmem:[%s533 + $0x150] sm:$0xff]
      %v563 = vld [vmem:[%s533 + $0x158] sm:$0xff]
      %v564 = vld [vmem:[%s533 + $0x168] sm:$0xff]
      %v565 = vld [vmem:[%s533 + $0x170] sm:$0xff]
      %v566 = vpack.c.bf16 %v535, %v534
      %v567 = vpack.c.bf16 %v537, %v536
      %v568 = vpack.c.bf16 %v539, %v538
      %v569 = vpack.c.bf16 %v541, %v540
      %v570 = vpack.c.bf16 %v543, %v542
      %v571 = vpack.c.bf16 %v545, %v544
      %v572 = vpack.c.bf16 %v547, %v546
      %v573 = vpack.c.bf16 %v549, %v548
      %v574 = vpack.c.bf16 %v551, %v550
      %v575 = vpack.c.bf16 %v553, %v552
      %v576 = vpack.c.bf16 %v555, %v554
      %v577 = vpack.c.bf16 %v557, %v556
      %v578 = vpack.c.bf16 %v559, %v558
      %v579 = vpack.c.bf16 %v561, %v560
      %v580 = vpack.c.bf16 %v563, %v562
      %v581 = vpack.c.bf16 %v565, %v564
      %598 = vrot.lane.b32.xlu0 %v566, 12
      %v599 = vpop.permute.xlu0 %598
      %600 = vrot.lane.b32.xlu0 %v567, 12
      %v601 = vpop.permute.xlu0 %600
      %602 = vrot.lane.b32.xlu0 %v568, 12
      %v603 = vpop.permute.xlu0 %602
      %604 = vrot.lane.b32.xlu0 %v569, 12
      %v605 = vpop.permute.xlu0 %604
      %606 = vrot.lane.b32.xlu0 %v570, 12
      %v607 = vpop.permute.xlu0 %606
      %608 = vrot.lane.b32.xlu0 %v571, 12
      %v609 = vpop.permute.xlu0 %608
      %610 = vrot.lane.b32.xlu0 %v572, 12
      %v611 = vpop.permute.xlu0 %610
      %612 = vrot.lane.b32.xlu0 %v573, 12
      %v613 = vpop.permute.xlu0 %612
      %614 = vrot.lane.b32.xlu0 %v574, 12
      %v615 = vpop.permute.xlu0 %614
      %616 = vrot.lane.b32.xlu0 %v575, 12
      %v617 = vpop.permute.xlu0 %616
      %618 = vrot.lane.b32.xlu0 %v576, 12
      %v619 = vpop.permute.xlu0 %618
      %620 = vrot.lane.b32.xlu0 %v577, 12
      %v621 = vpop.permute.xlu0 %620
      %622 = vrot.lane.b32.xlu0 %v578, 12
      %v623 = vpop.permute.xlu0 %622
      %624 = vrot.lane.b32.xlu0 %v579, 12
      %v625 = vpop.permute.xlu0 %624
      %626 = vrot.lane.b32.xlu0 %v580, 12
      %v627 = vpop.permute.xlu0 %626
      %628 = vrot.lane.b32.xlu0 %v581, 12
      %v629 = vpop.permute.xlu0 %628
      %vm646 = vcmask 130144
      %647 = vst.msk [vmem:[#allocation2] sm:$0xff] %vm646, %v599
      %648 = vst.msk [vmem:[#allocation2 + $0x8] sm:$0xff] %vm646, %v601
      %649 = vst.msk [vmem:[#allocation2 + $0x10] sm:$0xff] %vm646, %v603
      %650 = vst.msk [vmem:[#allocation2 + $0x18] sm:$0xff] %vm646, %v605
      %651 = vst.msk [vmem:[#allocation2 + $0x20] sm:$0xff] %vm646, %v607
      %652 = vst.msk [vmem:[#allocation2 + $0x28] sm:$0xff] %vm646, %v609
      %653 = vst.msk [vmem:[#allocation2 + $0x30] sm:$0xff] %vm646, %v611
      %654 = vst.msk [vmem:[#allocation2 + $0x38] sm:$0xff] %vm646, %v613
      %655 = vst.msk [vmem:[#allocation2 + $0x40] sm:$0xff] %vm646, %v615
      %656 = vst.msk [vmem:[#allocation2 + $0x48] sm:$0xff] %vm646, %v617
      %657 = vst.msk [vmem:[#allocation2 + $0x50] sm:$0xff] %vm646, %v619
      %658 = vst.msk [vmem:[#allocation2 + $0x58] sm:$0xff] %vm646, %v621
      %659 = vst.msk [vmem:[#allocation2 + $0x60] sm:$0xff] %vm646, %v623
      %660 = vst.msk [vmem:[#allocation2 + $0x68] sm:$0xff] %vm646, %v625
      %661 = vst.msk [vmem:[#allocation2 + $0x70] sm:$0xff] %vm646, %v627
      %662 = vst.msk [vmem:[#allocation2 + $0x78] sm:$0xff] %vm646, %v629
      %v663 = vld [vmem:[%s533 + $0x1] sm:$0xff]
      %v664 = vld [vmem:[%s533 + $0x9] sm:$0xff]
      %v665 = vld [vmem:[%s533 + $0x19] sm:$0xff]
      %v666 = vld [vmem:[%s533 + $0x21] sm:$0xff]
      %v667 = vld [vmem:[%s533 + $0x31] sm:$0xff]
      %v668 = vld [vmem:[%s533 + $0x39] sm:$0xff]
      %v669 = vld [vmem:[%s533 + $0x49] sm:$0xff]
      %v670 = vld [vmem:[%s533 + $0x51] sm:$0xff]
      %v671 = vld [vmem:[%s533 + $0x61] sm:$0xff]
      %v672 = vld [vmem:[%s533 + $0x69] sm:$0xff]
      %v673 = vld [vmem:[%s533 + $0x79] sm:$0xff]
      %v674 = vld [vmem:[%s533 + $0x81] sm:$0xff]
      %v675 = vld [vmem:[%s533 + $0x91] sm:$0xff]
      %v676 = vld [vmem:[%s533 + $0x99] sm:$0xff]
      %v677 = vld [vmem:[%s533 + $0xa9] sm:$0xff]
      %v678 = vld [vmem:[%s533 + $0xb1] sm:$0xff]
      %v679 = vld [vmem:[%s533 + $0xc1] sm:$0xff]
      %v680 = vld [vmem:[%s533 + $0xc9] sm:$0xff]
      %v681 = vld [vmem:[%s533 + $0xd9] sm:$0xff]
      %v682 = vld [vmem:[%s533 + $0xe1] sm:$0xff]
      %v683 = vld [vmem:[%s533 + $0xf1] sm:$0xff]
      %v684 = vld [vmem:[%s533 + $0xf9] sm:$0xff]
      %v685 = vld [vmem:[%s533 + $0x109] sm:$0xff]
      %v686 = vld [vmem:[%s533 + $0x111] sm:$0xff]
      %v687 = vld [vmem:[%s533 + $0x121] sm:$0xff]
      %v688 = vld [vmem:[%s533 + $0x129] sm:$0xff]
      %v689 = vld [vmem:[%s533 + $0x139] sm:$0xff]
      %v690 = vld [vmem:[%s533 + $0x141] sm:$0xff]
      %v691 = vld [vmem:[%s533 + $0x151] sm:$0xff]
      %v692 = vld [vmem:[%s533 + $0x159] sm:$0xff]
      %v693 = vld [vmem:[%s533 + $0x169] sm:$0xff]
      %v694 = vld [vmem:[%s533 + $0x171] sm:$0xff]
      %v695 = vpack.c.bf16 %v664, %v663
      %v696 = vpack.c.bf16 %v666, %v665
      %v697 = vpack.c.bf16 %v668, %v667
      %v698 = vpack.c.bf16 %v670, %v669
      %v699 = vpack.c.bf16 %v672, %v671
      %v700 = vpack.c.bf16 %v674, %v673
      %v701 = vpack.c.bf16 %v676, %v675
      %v702 = vpack.c.bf16 %v678, %v677
      %v703 = vpack.c.bf16 %v680, %v679
      %v704 = vpack.c.bf16 %v682, %v681
      %v705 = vpack.c.bf16 %v684, %v683
      %v706 = vpack.c.bf16 %v686, %v685
      %v707 = vpack.c.bf16 %v688, %v687
      %v708 = vpack.c.bf16 %v690, %v689
      %v709 = vpack.c.bf16 %v692, %v691
      %v710 = vpack.c.bf16 %v694, %v693
      %727 = vrot.lane.b32.xlu0 %v695, 16
      %v728 = vpop.permute.xlu0 %727
      %729 = vrot.lane.b32.xlu0 %v696, 16
      %v730 = vpop.permute.xlu0 %729
      %731 = vrot.lane.b32.xlu0 %v697, 16
      %v732 = vpop.permute.xlu0 %731
      %733 = vrot.lane.b32.xlu0 %v698, 16
      %v734 = vpop.permute.xlu0 %733
      %735 = vrot.lane.b32.xlu0 %v699, 16
      %v736 = vpop.permute.xlu0 %735
      %737 = vrot.lane.b32.xlu0 %v700, 16
      %v738 = vpop.permute.xlu0 %737
      %739 = vrot.lane.b32.xlu0 %v701, 16
      %v740 = vpop.permute.xlu0 %739
      %741 = vrot.lane.b32.xlu0 %v702, 16
      %v742 = vpop.permute.xlu0 %741
      %743 = vrot.lane.b32.xlu0 %v703, 16
      %v744 = vpop.permute.xlu0 %743
      %745 = vrot.lane.b32.xlu0 %v704, 16
      %v746 = vpop.permute.xlu0 %745
      %747 = vrot.lane.b32.xlu0 %v705, 16
      %v748 = vpop.permute.xlu0 %747
      %749 = vrot.lane.b32.xlu0 %v706, 16
      %v750 = vpop.permute.xlu0 %749
      %751 = vrot.lane.b32.xlu0 %v707, 16
      %v752 = vpop.permute.xlu0 %751
      %753 = vrot.lane.b32.xlu0 %v708, 16
      %v754 = vpop.permute.xlu0 %753
      %755 = vrot.lane.b32.xlu0 %v709, 16
      %v756 = vpop.permute.xlu0 %755
      %757 = vrot.lane.b32.xlu0 %v710, 16
      %v758 = vpop.permute.xlu0 %757
      %vm775 = vcmask 162944
      %776 = vst.msk [vmem:[#allocation2] sm:$0xff] %vm775, %v728
      %777 = vst.msk [vmem:[#allocation2 + $0x8] sm:$0xff] %vm775, %v730
      %778 = vst.msk [vmem:[#allocation2 + $0x10] sm:$0xff] %vm775, %v732
      %779 = vst.msk [vmem:[#allocation2 + $0x18] sm:$0xff] %vm775, %v734
      %780 = vst.msk [vmem:[#allocation2 + $0x20] sm:$0xff] %vm775, %v736
      %781 = vst.msk [vmem:[#allocation2 + $0x28] sm:$0xff] %vm775, %v738
      %782 = vst.msk [vmem:[#allocation2 + $0x30] sm:$0xff] %vm775, %v740
      %783 = vst.msk [vmem:[#allocation2 + $0x38] sm:$0xff] %vm775, %v742
      %784 = vst.msk [vmem:[#allocation2 + $0x40] sm:$0xff] %vm775, %v744
      %785 = vst.msk [vmem:[#allocation2 + $0x48] sm:$0xff] %vm775, %v746
      %786 = vst.msk [vmem:[#allocation2 + $0x50] sm:$0xff] %vm775, %v748
      %787 = vst.msk [vmem:[#allocation2 + $0x58] sm:$0xff] %vm775, %v750
      %788 = vst.msk [vmem:[#allocation2 + $0x60] sm:$0xff] %vm775, %v752
      %789 = vst.msk [vmem:[#allocation2 + $0x68] sm:$0xff] %vm775, %v754
      %790 = vst.msk [vmem:[#allocation2 + $0x70] sm:$0xff] %vm775, %v756
      %791 = vst.msk [vmem:[#allocation2 + $0x78] sm:$0xff] %vm775, %v758
      %v792 = vld [vmem:[%s533 + $0x2] sm:$0xff]
      %v793 = vld [vmem:[%s533 + $0xa] sm:$0xff]
      %v794 = vld [vmem:[%s533 + $0x1a] sm:$0xff]
      %v795 = vld [vmem:[%s533 + $0x22] sm:$0xff]
      %v796 = vld [vmem:[%s533 + $0x32] sm:$0xff]
      %v797 = vld [vmem:[%s533 + $0x3a] sm:$0xff]
      %v798 = vld [vmem:[%s533 + $0x4a] sm:$0xff]
      %v799 = vld [vmem:[%s533 + $0x52] sm:$0xff]
      %v800 = vld [vmem:[%s533 + $0x62] sm:$0xff]
      %v801 = vld [vmem:[%s533 + $0x6a] sm:$0xff]
      %v802 = vld [vmem:[%s533 + $0x7a] sm:$0xff]
      %v803 = vld [vmem:[%s533 + $0x82] sm:$0xff]
      %v804 = vld [vmem:[%s533 + $0x92] sm:$0xff]
      %v805 = vld [vmem:[%s533 + $0x9a] sm:$0xff]
      %v806 = vld [vmem:[%s533 + $0xaa] sm:$0xff]
      %v807 = vld [vmem:[%s533 + $0xb2] sm:$0xff]
      %v808 = vld [vmem:[%s533 + $0xc2] sm:$0xff]
      %v809 = vld [vmem:[%s533 + $0xca] sm:$0xff]
      %v810 = vld [vmem:[%s533 + $0xda] sm:$0xff]
      %v811 = vld [vmem:[%s533 + $0xe2] sm:$0xff]
      %v812 = vld [vmem:[%s533 + $0xf2] sm:$0xff]
      %v813 = vld [vmem:[%s533 + $0xfa] sm:$0xff]
      %v814 = vld [vmem:[%s533 + $0x10a] sm:$0xff]
      %v815 = vld [vmem:[%s533 + $0x112] sm:$0xff]
      %v816 = vld [vmem:[%s533 + $0x122] sm:$0xff]
      %v817 = vld [vmem:[%s533 + $0x12a] sm:$0xff]
      %v818 = vld [vmem:[%s533 + $0x13a] sm:$0xff]
      %v819 = vld [vmem:[%s533 + $0x142] sm:$0xff]
      %v820 = vld [vmem:[%s533 + $0x152] sm:$0xff]
      %v821 = vld [vmem:[%s533 + $0x15a] sm:$0xff]
      %v822 = vld [vmem:[%s533 + $0x16a] sm:$0xff]
      %v823 = vld [vmem:[%s533 + $0x172] sm:$0xff]
      %v824 = vpack.c.bf16 %v793, %v792
      %v825 = vpack.c.bf16 %v795, %v794
      %v826 = vpack.c.bf16 %v797, %v796
      %v827 = vpack.c.bf16 %v799, %v798
      %v828 = vpack.c.bf16 %v801, %v800
      %v829 = vpack.c.bf16 %v803, %v802
      %v830 = vpack.c.bf16 %v805, %v804
      %v831 = vpack.c.bf16 %v807, %v806
      %v832 = vpack.c.bf16 %v809, %v808
      %v833 = vpack.c.bf16 %v811, %v810
      %v834 = vpack.c.bf16 %v813, %v812
      %v835 = vpack.c.bf16 %v815, %v814
      %v836 = vpack.c.bf16 %v817, %v816
      %v837 = vpack.c.bf16 %v819, %v818
      %v838 = vpack.c.bf16 %v821, %v820
      %v839 = vpack.c.bf16 %v823, %v822
      %856 = vrot.lane.b32.xlu0 %v824, 20
      %v857 = vpop.permute.xlu0 %856
      %858 = vrot.lane.b32.xlu0 %v825, 20
      %v859 = vpop.permute.xlu0 %858
      %860 = vrot.lane.b32.xlu0 %v826, 20
      %v861 = vpop.permute.xlu0 %860
      %862 = vrot.lane.b32.xlu0 %v827, 20
      %v863 = vpop.permute.xlu0 %862
      %864 = vrot.lane.b32.xlu0 %v828, 20
      %v865 = vpop.permute.xlu0 %864
      %866 = vrot.lane.b32.xlu0 %v829, 20
      %v867 = vpop.permute.xlu0 %866
      %868 = vrot.lane.b32.xlu0 %v830, 20
      %v869 = vpop.permute.xlu0 %868
      %870 = vrot.lane.b32.xlu0 %v831, 20
      %v871 = vpop.permute.xlu0 %870
      %872 = vrot.lane.b32.xlu0 %v832, 20
      %v873 = vpop.permute.xlu0 %872
      %874 = vrot.lane.b32.xlu0 %v833, 20
      %v875 = vpop.permute.xlu0 %874
      %876 = vrot.lane.b32.xlu0 %v834, 20
      %v877 = vpop.permute.xlu0 %876
      %878 = vrot.lane.b32.xlu0 %v835, 20
      %v879 = vpop.permute.xlu0 %878
      %880 = vrot.lane.b32.xlu0 %v836, 20
      %v881 = vpop.permute.xlu0 %880
      %882 = vrot.lane.b32.xlu0 %v837, 20
      %v883 = vpop.permute.xlu0 %882
      %884 = vrot.lane.b32.xlu0 %v838, 20
      %v885 = vpop.permute.xlu0 %884
      %886 = vrot.lane.b32.xlu0 %v839, 20
      %v887 = vpop.permute.xlu0 %886
      %vm904 = vcmask 195744
      %905 = vst.msk [vmem:[#allocation2] sm:$0xff] %vm904, %v857
      %906 = vst.msk [vmem:[#allocation2 + $0x8] sm:$0xff] %vm904, %v859
      %907 = vst.msk [vmem:[#allocation2 + $0x10] sm:$0xff] %vm904, %v861
      %908 = vst.msk [vmem:[#allocation2 + $0x18] sm:$0xff] %vm904, %v863
      %909 = vst.msk [vmem:[#allocation2 + $0x20] sm:$0xff] %vm904, %v865
      %910 = vst.msk [vmem:[#allocation2 + $0x28] sm:$0xff] %vm904, %v867
      %911 = vst.msk [vmem:[#allocation2 + $0x30] sm:$0xff] %vm904, %v869
      %912 = vst.msk [vmem:[#allocation2 + $0x38] sm:$0xff] %vm904, %v871
      %913 = vst.msk [vmem:[#allocation2 + $0x40] sm:$0xff] %vm904, %v873
      %914 = vst.msk [vmem:[#allocation2 + $0x48] sm:$0xff] %vm904, %v875
      %915 = vst.msk [vmem:[#allocation2 + $0x50] sm:$0xff] %vm904, %v877
      %916 = vst.msk [vmem:[#allocation2 + $0x58] sm:$0xff] %vm904, %v879
      %917 = vst.msk [vmem:[#allocation2 + $0x60] sm:$0xff] %vm904, %v881
      %918 = vst.msk [vmem:[#allocation2 + $0x68] sm:$0xff] %vm904, %v883
      %919 = vst.msk [vmem:[#allocation2 + $0x70] sm:$0xff] %vm904, %v885
      %920 = vst.msk [vmem:[#allocation2 + $0x78] sm:$0xff] %vm904, %v887
      %s921 = scalar_lea.vmem %s199, 48
      %v922 = vld [vmem:[%s921] sm:$0xff]
      %v923 = vld [vmem:[%s921 + $0x8] sm:$0xff]
      %v924 = vld [vmem:[%s921 + $0x18] sm:$0xff]
      %v925 = vld [vmem:[%s921 + $0x20] sm:$0xff]
      %v926 = vld [vmem:[%s921 + $0x30] sm:$0xff]
      %v927 = vld [vmem:[%s921 + $0x38] sm:$0xff]
      %v928 = vld [vmem:[%s921 + $0x48] sm:$0xff]
      %v929 = vld [vmem:[%s921 + $0x50] sm:$0xff]
      %v930 = vld [vmem:[%s921 + $0x60] sm:$0xff]
      %v931 = vld [vmem:[%s921 + $0x68] sm:$0xff]
      %v932 = vld [vmem:[%s921 + $0x78] sm:$0xff]
      %v933 = vld [vmem:[%s921 + $0x80] sm:$0xff]
      %v934 = vld [vmem:[%s921 + $0x90] sm:$0xff]
      %v935 = vld [vmem:[%s921 + $0x98] sm:$0xff]
      %v936 = vld [vmem:[%s921 + $0xa8] sm:$0xff]
      %v937 = vld [vmem:[%s921 + $0xb0] sm:$0xff]
      %v938 = vld [vmem:[%s921 + $0xc0] sm:$0xff]
      %v939 = vld [vmem:[%s921 + $0xc8] sm:$0xff]
      %v940 = vld [vmem:[%s921 + $0xd8] sm:$0xff]
      %v941 = vld [vmem:[%s921 + $0xe0] sm:$0xff]
      %v942 = vld [vmem:[%s921 + $0xf0] sm:$0xff]
      %v943 = vld [vmem:[%s921 + $0xf8] sm:$0xff]
      %v944 = vld [vmem:[%s921 + $0x108] sm:$0xff]
      %v945 = vld [vmem:[%s921 + $0x110] sm:$0xff]
      %v946 = vld [vmem:[%s921 + $0x120] sm:$0xff]
      %v947 = vld [vmem:[%s921 + $0x128] sm:$0xff]
      %v948 = vld [vmem:[%s921 + $0x138] sm:$0xff]
      %v949 = vld [vmem:[%s921 + $0x140] sm:$0xff]
      %v950 = vld [vmem:[%s921 + $0x150] sm:$0xff]
      %v951 = vld [vmem:[%s921 + $0x158] sm:$0xff]
      %v952 = vld [vmem:[%s921 + $0x168] sm:$0xff]
      %v953 = vld [vmem:[%s921 + $0x170] sm:$0xff]
      %v954 = vpack.c.bf16 %v923, %v922
      %v955 = vpack.c.bf16 %v925, %v924
      %v956 = vpack.c.bf16 %v927, %v926
      %v957 = vpack.c.bf16 %v929, %v928
      %v958 = vpack.c.bf16 %v931, %v930
      %v959 = vpack.c.bf16 %v933, %v932
      %v960 = vpack.c.bf16 %v935, %v934
      %v961 = vpack.c.bf16 %v937, %v936
      %v962 = vpack.c.bf16 %v939, %v938
      %v963 = vpack.c.bf16 %v941, %v940
      %v964 = vpack.c.bf16 %v943, %v942
      %v965 = vpack.c.bf16 %v945, %v944
      %v966 = vpack.c.bf16 %v947, %v946
      %v967 = vpack.c.bf16 %v949, %v948
      %v968 = vpack.c.bf16 %v951, %v950
      %v969 = vpack.c.bf16 %v953, %v952
      %986 = vrot.lane.b32.xlu0 %v954, 24
      %v987 = vpop.permute.xlu0 %986
      %988 = vrot.lane.b32.xlu0 %v955, 24
      %v989 = vpop.permute.xlu0 %988
      %990 = vrot.lane.b32.xlu0 %v956, 24
      %v991 = vpop.permute.xlu0 %990
      %992 = vrot.lane.b32.xlu0 %v957, 24
      %v993 = vpop.permute.xlu0 %992
      %994 = vrot.lane.b32.xlu0 %v958, 24
      %v995 = vpop.permute.xlu0 %994
      %996 = vrot.lane.b32.xlu0 %v959, 24
      %v997 = vpop.permute.xlu0 %996
      %998 = vrot.lane.b32.xlu0 %v960, 24
      %v999 = vpop.permute.xlu0 %998
      %1000 = vrot.lane.b32.xlu0 %v961, 24
      %v1001 = vpop.permute.xlu0 %1000
      %1002 = vrot.lane.b32.xlu0 %v962, 24
      %v1003 = vpop.permute.xlu0 %1002
      %1004 = vrot.lane.b32.xlu0 %v963, 24
      %v1005 = vpop.permute.xlu0 %1004
      %1006 = vrot.lane.b32.xlu0 %v964, 24
      %v1007 = vpop.permute.xlu0 %1006
      %1008 = vrot.lane.b32.xlu0 %v965, 24
      %v1009 = vpop.permute.xlu0 %1008
      %1010 = vrot.lane.b32.xlu0 %v966, 24
      %v1011 = vpop.permute.xlu0 %1010
      %1012 = vrot.lane.b32.xlu0 %v967, 24
      %v1013 = vpop.permute.xlu0 %1012
      %1014 = vrot.lane.b32.xlu0 %v968, 24
      %v1015 = vpop.permute.xlu0 %1014
      %1016 = vrot.lane.b32.xlu0 %v969, 24
      %v1017 = vpop.permute.xlu0 %1016
      %vm1034 = vcmask 228544
      %1035 = vst.msk [vmem:[#allocation2] sm:$0xff] %vm1034, %v987
      %1036 = vst.msk [vmem:[#allocation2 + $0x8] sm:$0xff] %vm1034, %v989
      %1037 = vst.msk [vmem:[#allocation2 + $0x10] sm:$0xff] %vm1034, %v991
      %1038 = vst.msk [vmem:[#allocation2 + $0x18] sm:$0xff] %vm1034, %v993
      %1039 = vst.msk [vmem:[#allocation2 + $0x20] sm:$0xff] %vm1034, %v995
      %1040 = vst.msk [vmem:[#allocation2 + $0x28] sm:$0xff] %vm1034, %v997
      %1041 = vst.msk [vmem:[#allocation2 + $0x30] sm:$0xff] %vm1034, %v999
      %1042 = vst.msk [vmem:[#allocation2 + $0x38] sm:$0xff] %vm1034, %v1001
      %1043 = vst.msk [vmem:[#allocation2 + $0x40] sm:$0xff] %vm1034, %v1003
      %1044 = vst.msk [vmem:[#allocation2 + $0x48] sm:$0xff] %vm1034, %v1005
      %1045 = vst.msk [vmem:[#allocation2 + $0x50] sm:$0xff] %vm1034, %v1007
      %1046 = vst.msk [vmem:[#allocation2 + $0x58] sm:$0xff] %vm1034, %v1009
      %1047 = vst.msk [vmem:[#allocation2 + $0x60] sm:$0xff] %vm1034, %v1011
      %1048 = vst.msk [vmem:[#allocation2 + $0x68] sm:$0xff] %vm1034, %v1013
      %1049 = vst.msk [vmem:[#allocation2 + $0x70] sm:$0xff] %vm1034, %v1015
      %1050 = vst.msk [vmem:[#allocation2 + $0x78] sm:$0xff] %vm1034, %v1017
      %v1051 = vld [vmem:[%s921 + $0x1] sm:$0xff]
      %v1052 = vld [vmem:[%s921 + $0x9] sm:$0xff]
      %v1053 = vld [vmem:[%s921 + $0x19] sm:$0xff]
      %v1054 = vld [vmem:[%s921 + $0x21] sm:$0xff]
      %v1055 = vld [vmem:[%s921 + $0x31] sm:$0xff]
      %v1056 = vld [vmem:[%s921 + $0x39] sm:$0xff]
      %v1057 = vld [vmem:[%s921 + $0x49] sm:$0xff]
      %v1058 = vld [vmem:[%s921 + $0x51] sm:$0xff]
      %v1059 = vld [vmem:[%s921 + $0x61] sm:$0xff]
      %v1060 = vld [vmem:[%s921 + $0x69] sm:$0xff]
      %v1061 = vld [vmem:[%s921 + $0x79] sm:$0xff]
      %v1062 = vld [vmem:[%s921 + $0x81] sm:$0xff]
      %v1063 = vld [vmem:[%s921 + $0x91] sm:$0xff]
      %v1064 = vld [vmem:[%s921 + $0x99] sm:$0xff]
      %v1065 = vld [vmem:[%s921 + $0xa9] sm:$0xff]
      %v1066 = vld [vmem:[%s921 + $0xb1] sm:$0xff]
      %v1067 = vld [vmem:[%s921 + $0xc1] sm:$0xff]
      %v1068 = vld [vmem:[%s921 + $0xc9] sm:$0xff]
      %v1069 = vld [vmem:[%s921 + $0xd9] sm:$0xff]
      %v1070 = vld [vmem:[%s921 + $0xe1] sm:$0xff]
      %v1071 = vld [vmem:[%s921 + $0xf1] sm:$0xff]
      %v1072 = vld [vmem:[%s921 + $0xf9] sm:$0xff]
      %v1073 = vld [vmem:[%s921 + $0x109] sm:$0xff]
      %v1074 = vld [vmem:[%s921 + $0x111] sm:$0xff]
      %v1075 = vld [vmem:[%s921 + $0x121] sm:$0xff]
      %v1076 = vld [vmem:[%s921 + $0x129] sm:$0xff]
      %v1077 = vld [vmem:[%s921 + $0x139] sm:$0xff]
      %v1078 = vld [vmem:[%s921 + $0x141] sm:$0xff]
      %v1079 = vld [vmem:[%s921 + $0x151] sm:$0xff]
      %v1080 = vld [vmem:[%s921 + $0x159] sm:$0xff]
      %v1081 = vld [vmem:[%s921 + $0x169] sm:$0xff]
      %v1082 = vld [vmem:[%s921 + $0x171] sm:$0xff]
      %v1083 = vpack.c.bf16 %v1052, %v1051
      %v1084 = vpack.c.bf16 %v1054, %v1053
      %v1085 = vpack.c.bf16 %v1056, %v1055
      %v1086 = vpack.c.bf16 %v1058, %v1057
      %v1087 = vpack.c.bf16 %v1060, %v1059
      %v1088 = vpack.c.bf16 %v1062, %v1061
      %v1089 = vpack.c.bf16 %v1064, %v1063
      %v1090 = vpack.c.bf16 %v1066, %v1065
      %v1091 = vpack.c.bf16 %v1068, %v1067
      %v1092 = vpack.c.bf16 %v1070, %v1069
      %v1093 = vpack.c.bf16 %v1072, %v1071
      %v1094 = vpack.c.bf16 %v1074, %v1073
      %v1095 = vpack.c.bf16 %v1076, %v1075
      %v1096 = vpack.c.bf16 %v1078, %v1077
      %v1097 = vpack.c.bf16 %v1080, %v1079
      %v1098 = vpack.c.bf16 %v1082, %v1081
      %1115 = vrot.lane.b32.xlu0 %v1083, 28
      %v1116 = vpop.permute.xlu0 %1115
      %1117 = vrot.lane.b32.xlu0 %v1084, 28
      %v1118 = vpop.permute.xlu0 %1117
      %1119 = vrot.lane.b32.xlu0 %v1085, 28
      %v1120 = vpop.permute.xlu0 %1119
      %1121 = vrot.lane.b32.xlu0 %v1086, 28
      %v1122 = vpop.permute.xlu0 %1121
      %1123 = vrot.lane.b32.xlu0 %v1087, 28
      %v1124 = vpop.permute.xlu0 %1123
      %1125 = vrot.lane.b32.xlu0 %v1088, 28
      %v1126 = vpop.permute.xlu0 %1125
      %1127 = vrot.lane.b32.xlu0 %v1089, 28
      %v1128 = vpop.permute.xlu0 %1127
      %1129 = vrot.lane.b32.xlu0 %v1090, 28
      %v1130 = vpop.permute.xlu0 %1129
      %1131 = vrot.lane.b32.xlu0 %v1091, 28
      %v1132 = vpop.permute.xlu0 %1131
      %1133 = vrot.lane.b32.xlu0 %v1092, 28
      %v1134 = vpop.permute.xlu0 %1133
      %1135 = vrot.lane.b32.xlu0 %v1093, 28
      %v1136 = vpop.permute.xlu0 %1135
      %1137 = vrot.lane.b32.xlu0 %v1094, 28
      %v1138 = vpop.permute.xlu0 %1137
      %1139 = vrot.lane.b32.xlu0 %v1095, 28
      %v1140 = vpop.permute.xlu0 %1139
      %1141 = vrot.lane.b32.xlu0 %v1096, 28
      %v1142 = vpop.permute.xlu0 %1141
      %1143 = vrot.lane.b32.xlu0 %v1097, 28
      %v1144 = vpop.permute.xlu0 %1143
      %1145 = vrot.lane.b32.xlu0 %v1098, 28
      %v1146 = vpop.permute.xlu0 %1145
      %vm1163 = vcmask 261344
      %1164 = vst.msk [vmem:[#allocation2] sm:$0xff] %vm1163, %v1116
      %1165 = vst.msk [vmem:[#allocation2 + $0x8] sm:$0xff] %vm1163, %v1118
      %1166 = vst.msk [vmem:[#allocation2 + $0x10] sm:$0xff] %vm1163, %v1120
      %1167 = vst.msk [vmem:[#allocation2 + $0x18] sm:$0xff] %vm1163, %v1122
      %1168 = vst.msk [vmem:[#allocation2 + $0x20] sm:$0xff] %vm1163, %v1124
      %1169 = vst.msk [vmem:[#allocation2 + $0x28] sm:$0xff] %vm1163, %v1126
      %1170 = vst.msk [vmem:[#allocation2 + $0x30] sm:$0xff] %vm1163, %v1128
      %1171 = vst.msk [vmem:[#allocation2 + $0x38] sm:$0xff] %vm1163, %v1130
      %1172 = vst.msk [vmem:[#allocation2 + $0x40] sm:$0xff] %vm1163, %v1132
      %1173 = vst.msk [vmem:[#allocation2 + $0x48] sm:$0xff] %vm1163, %v1134
      %1174 = vst.msk [vmem:[#allocation2 + $0x50] sm:$0xff] %vm1163, %v1136
      %1175 = vst.msk [vmem:[#allocation2 + $0x58] sm:$0xff] %vm1163, %v1138
      %1176 = vst.msk [vmem:[#allocation2 + $0x60] sm:$0xff] %vm1163, %v1140
      %1177 = vst.msk [vmem:[#allocation2 + $0x68] sm:$0xff] %vm1163, %v1142
      %1178 = vst.msk [vmem:[#allocation2 + $0x70] sm:$0xff] %vm1163, %v1144
      %1179 = vst.msk [vmem:[#allocation2 + $0x78] sm:$0xff] %vm1163, %v1146
      %v1180 = vld [vmem:[%s921 + $0x2] sm:$0xff]
      %v1181 = vld [vmem:[%s921 + $0xa] sm:$0xff]
      %v1182 = vld [vmem:[%s921 + $0x1a] sm:$0xff]
      %v1183 = vld [vmem:[%s921 + $0x22] sm:$0xff]
      %v1184 = vld [vmem:[%s921 + $0x32] sm:$0xff]
      %v1185 = vld [vmem:[%s921 + $0x3a] sm:$0xff]
      %v1186 = vld [vmem:[%s921 + $0x4a] sm:$0xff]
      %v1187 = vld [vmem:[%s921 + $0x52] sm:$0xff]
      %v1188 = vld [vmem:[%s921 + $0x62] sm:$0xff]
      %v1189 = vld [vmem:[%s921 + $0x6a] sm:$0xff]
      %v1190 = vld [vmem:[%s921 + $0x7a] sm:$0xff]
      %v1191 = vld [vmem:[%s921 + $0x82] sm:$0xff]
      %v1192 = vld [vmem:[%s921 + $0x92] sm:$0xff]
      %v1193 = vld [vmem:[%s921 + $0x9a] sm:$0xff]
      %v1194 = vld [vmem:[%s921 + $0xaa] sm:$0xff]
      %v1195 = vld [vmem:[%s921 + $0xb2] sm:$0xff]
      %v1196 = vld [vmem:[%s921 + $0xc2] sm:$0xff]
      %v1197 = vld [vmem:[%s921 + $0xca] sm:$0xff]
      %v1198 = vld [vmem:[%s921 + $0xda] sm:$0xff]
      %v1199 = vld [vmem:[%s921 + $0xe2] sm:$0xff]
      %v1200 = vld [vmem:[%s921 + $0xf2] sm:$0xff]
      %v1201 = vld [vmem:[%s921 + $0xfa] sm:$0xff]
      %v1202 = vld [vmem:[%s921 + $0x10a] sm:$0xff]
      %v1203 = vld [vmem:[%s921 + $0x112] sm:$0xff]
      %v1204 = vld [vmem:[%s921 + $0x122] sm:$0xff]
      %v1205 = vld [vmem:[%s921 + $0x12a] sm:$0xff]
      %v1206 = vld [vmem:[%s921 + $0x13a] sm:$0xff]
      %v1207 = vld [vmem:[%s921 + $0x142] sm:$0xff]
      %v1208 = vld [vmem:[%s921 + $0x152] sm:$0xff]
      %v1209 = vld [vmem:[%s921 + $0x15a] sm:$0xff]
      %v1210 = vld [vmem:[%s921 + $0x16a] sm:$0xff]
      %v1211 = vld [vmem:[%s921 + $0x172] sm:$0xff]
      %v1212 = vpack.c.bf16 %v1181, %v1180
      %v1213 = vpack.c.bf16 %v1183, %v1182
      %v1214 = vpack.c.bf16 %v1185, %v1184
      %v1215 = vpack.c.bf16 %v1187, %v1186
      %v1216 = vpack.c.bf16 %v1189, %v1188
      %v1217 = vpack.c.bf16 %v1191, %v1190
      %v1218 = vpack.c.bf16 %v1193, %v1192
      %v1219 = vpack.c.bf16 %v1195, %v1194
      %v1220 = vpack.c.bf16 %v1197, %v1196
      %v1221 = vpack.c.bf16 %v1199, %v1198
      %v1222 = vpack.c.bf16 %v1201, %v1200
      %v1223 = vpack.c.bf16 %v1203, %v1202
      %v1224 = vpack.c.bf16 %v1205, %v1204
      %v1225 = vpack.c.bf16 %v1207, %v1206
      %v1226 = vpack.c.bf16 %v1209, %v1208
      %v1227 = vpack.c.bf16 %v1211, %v1210
      %1244 = vrot.lane.b32.xlu0 %v1212, 32
      %v1245 = vpop.permute.xlu0 %1244
      %1246 = vrot.lane.b32.xlu0 %v1213, 32
      %v1247 = vpop.permute.xlu0 %1246
      %1248 = vrot.lane.b32.xlu0 %v1214, 32
      %v1249 = vpop.permute.xlu0 %1248
      %1250 = vrot.lane.b32.xlu0 %v1215, 32
      %v1251 = vpop.permute.xlu0 %1250
      %1252 = vrot.lane.b32.xlu0 %v1216, 32
      %v1253 = vpop.permute.xlu0 %1252
      %1254 = vrot.lane.b32.xlu0 %v1217, 32
      %v1255 = vpop.permute.xlu0 %1254
      %1256 = vrot.lane.b32.xlu0 %v1218, 32
      %v1257 = vpop.permute.xlu0 %1256
      %1258 = vrot.lane.b32.xlu0 %v1219, 32
      %v1259 = vpop.permute.xlu0 %1258
      %1260 = vrot.lane.b32.xlu0 %v1220, 32
      %v1261 = vpop.permute.xlu0 %1260
      %1262 = vrot.lane.b32.xlu0 %v1221, 32
      %v1263 = vpop.permute.xlu0 %1262
      %1264 = vrot.lane.b32.xlu0 %v1222, 32
      %v1265 = vpop.permute.xlu0 %1264
      %1266 = vrot.lane.b32.xlu0 %v1223, 32
      %v1267 = vpop.permute.xlu0 %1266
      %1268 = vrot.lane.b32.xlu0 %v1224, 32
      %v1269 = vpop.permute.xlu0 %1268
      %1270 = vrot.lane.b32.xlu0 %v1225, 32
      %v1271 = vpop.permute.xlu0 %1270
      %1272 = vrot.lane.b32.xlu0 %v1226, 32
      %v1273 = vpop.permute.xlu0 %1272
      %1274 = vrot.lane.b32.xlu0 %v1227, 32
      %v1275 = vpop.permute.xlu0 %1274
      %vm1292 = vcmask 294144
      %1293 = vst.msk [vmem:[#allocation2] sm:$0xff] %vm1292, %v1245
      %1294 = vst.msk [vmem:[#allocation2 + $0x8] sm:$0xff] %vm1292, %v1247
      %1295 = vst.msk [vmem:[#allocation2 + $0x10] sm:$0xff] %vm1292, %v1249
      %1296 = vst.msk [vmem:[#allocation2 + $0x18] sm:$0xff] %vm1292, %v1251
      %1297 = vst.msk [vmem:[#allocation2 + $0x20] sm:$0xff] %vm1292, %v1253
      %1298 = vst.msk [vmem:[#allocation2 + $0x28] sm:$0xff] %vm1292, %v1255
      %1299 = vst.msk [vmem:[#allocation2 + $0x30] sm:$0xff] %vm1292, %v1257
      %1300 = vst.msk [vmem:[#allocation2 + $0x38] sm:$0xff] %vm1292, %v1259
      %1301 = vst.msk [vmem:[#allocation2 + $0x40] sm:$0xff] %vm1292, %v1261
      %1302 = vst.msk [vmem:[#allocation2 + $0x48] sm:$0xff] %vm1292, %v1263
      %1303 = vst.msk [vmem:[#allocation2 + $0x50] sm:$0xff] %vm1292, %v1265
      %1304 = vst.msk [vmem:[#allocation2 + $0x58] sm:$0xff] %vm1292, %v1267
      %1305 = vst.msk [vmem:[#allocation2 + $0x60] sm:$0xff] %vm1292, %v1269
      %1306 = vst.msk [vmem:[#allocation2 + $0x68] sm:$0xff] %vm1292, %v1271
      %1307 = vst.msk [vmem:[#allocation2 + $0x70] sm:$0xff] %vm1292, %v1273
      %1308 = vst.msk [vmem:[#allocation2 + $0x78] sm:$0xff] %vm1292, %v1275
      %v1309 = vld [vmem:[#allocation2] sm:$0xff]
      %v1310 = vld [vmem:[#allocation2 + $0x8] sm:$0xff]
      %v1311 = vld [vmem:[#allocation2 + $0x10] sm:$0xff]
      %v1312 = vld [vmem:[#allocation2 + $0x18] sm:$0xff]
      %v1313 = vld [vmem:[#allocation2 + $0x20] sm:$0xff]
      %v1314 = vld [vmem:[#allocation2 + $0x28] sm:$0xff]
      %v1315 = vld [vmem:[#allocation2 + $0x30] sm:$0xff]
      %v1316 = vld [vmem:[#allocation2 + $0x38] sm:$0xff]
      %v1317 = vld [vmem:[#allocation2 + $0x40] sm:$0xff]
      %v1318 = vld [vmem:[#allocation2 + $0x48] sm:$0xff]
      %v1319 = vld [vmem:[#allocation2 + $0x50] sm:$0xff]
      %v1320 = vld [vmem:[#allocation2 + $0x58] sm:$0xff]
      %v1321 = vld [vmem:[#allocation2 + $0x60] sm:$0xff]
      %v1322 = vld [vmem:[#allocation2 + $0x68] sm:$0xff]
      %v1323 = vld [vmem:[#allocation2 + $0x70] sm:$0xff]
      %v1324 = vld [vmem:[#allocation2 + $0x78] sm:$0xff]
      %v1325 = vld [vmem:[%s1] sm:$0xf]
      %v1326 = vld [vmem:[%s1 + $0x4] sm:$0xf]
      %v1327 = vld [vmem:[%s1 + $0x8] sm:$0xf]
      %v1328 = vld [vmem:[%s1 + $0xc] sm:$0xf]
      %v1329 = vld [vmem:[%s1 + $0x10] sm:$0x3]
      %v1330 = vld [vmem:[%s2] sm:$0x1]
      %v1332 = vlaneseq
      %v1333 = vshrl.u32 %v1332, 7
      %v1334 = vsub.s32 0, %v1333
      %v1335 = vrot.slane %v1330, %v1334
      %v1342 = vunpack.c.l.b16 %v1325
      %v1343 = vunpack.c.l.b16 %v1326
      %v1344 = vunpack.c.l.b16 %v1327
      %v1345 = vunpack.c.l.b16 %v1328
      %v1346 = vunpack.c.l.b16 %v1329
      %v1347 = vpack.c.b16 %v1343, %v1342
      %v1348 = vpack.c.b16 %v1345, %v1344
      %v1349 = vpack.c.b16 %v1346, %v1346
      %vm1352 = vcmask 293888
      %v1354 = vsel %vm1352, %v1309, 0
      %v1357 = vsel %vm1352, %v1310, 0
      %v1360 = vsel %vm1352, %v1311, 0
      %v1363 = vsel %vm1352, %v1312, 0
      %v1366 = vsel %vm1352, %v1313, 0
      %v1369 = vsel %vm1352, %v1314, 0
      %v1372 = vsel %vm1352, %v1315, 0
      %v1375 = vsel %vm1352, %v1316, 0
      %v1378 = vsel %vm1352, %v1317, 0
      %v1381 = vsel %vm1352, %v1318, 0
      %v1384 = vsel %vm1352, %v1319, 0
      %v1387 = vsel %vm1352, %v1320, 0
      %v1390 = vsel %vm1352, %v1321, 0
      %v1393 = vsel %vm1352, %v1322, 0
      %v1396 = vsel %vm1352, %v1323, 0
      %v1399 = vsel %vm1352, %v1324, 0
      %vm1401 = vcmask 1041408
      %v1403 = vsel %vm1401, %v1349, 0
      %1405 = vmatprep.subr.bf16.mxu0 0
      %1406 = vmatpush1.bf16.msra.mxu0 %v1347
      %1407 = vmatprep.subr.bf16.mxu0 0
      %1408 = vmatpush1.bf16.msra.mxu0 %v1348
      %1409 = vmatprep.subr.bf16.mxu0 0
      %1410 = vmatpush1.bf16.msra.mxu0 %v1403
      %1411 = vmatprep.subr.bf16.mxu0 0
      %1412 = vmatpush1.bf16.msra.mxu0 0
      %1413 = vmatprep.subr.bf16.mxu0 0
      %1414 = vmatpush1.bf16.msra.mxu0 0
      %1415 = vmatprep.subr.bf16.mxu0 0
      %1416 = vmatpush1.bf16.msra.mxu0 0
      %1417 = vmatprep.subr.bf16.mxu0 0
      %1418 = vmatpush1.bf16.msra.mxu0 0
      %1419 = vmatprep.subr.bf16.mxu0 0
      %1420 = vmatpush1.bf16.msra.mxu0 0
      %1421 = vmatprep.subr.bf16.mxu0 0
      %1422 = vmatpush1.bf16.msra.mxu0 0
      %1423 = vmatprep.subr.bf16.mxu0 0
      %1424 = vmatpush1.bf16.msra.mxu0 0
      %1425 = vmatprep.subr.bf16.mxu0 0
      %1426 = vmatpush1.bf16.msra.mxu0 0
      %1427 = vmatprep.subr.bf16.mxu0 0
      %1428 = vmatpush1.bf16.msra.mxu0 0
      %1429 = vmatprep.subr.bf16.mxu0 0
      %1430 = vmatpush1.bf16.msra.mxu0 0
      %1431 = vmatprep.subr.bf16.mxu0 0
      %1432 = vmatpush1.bf16.msra.mxu0 0
      %1433 = vmatprep.subr.bf16.mxu0 0
      %1434 = vmatpush1.bf16.msra.mxu0 0
      %1435 = vmatprep.subr.bf16.mxu0 0
      %1436 = vmatpush1.bf16.msra.mxu0 0
      %1437 = vmatprep.mubr.bf16.mxu0 0
      %1438 = vmatmul.mubr.bf16.gmra.mrb[0].mxu0 %v1354
      %v1439 = vpop.f32.mrb[0].mxu0
      %v1440 = vadd.f32 %v1335, %v1439
      %v1441 = vpop.f32.mrb[0].mxu0
      %v1442 = vpop.f32.mrb[0].mxu0
      %v1443 = vadd.f32 %v1335, %v1442
      %v1444 = vpop.f32.mrb[0].mxu0
      %1445 = vmatprep.mubr.bf16.mxu0 0
      %1446 = vmatmul.mubr.bf16.gmra.mrb[0].mxu0 %v1357
      %v1447 = vpop.f32.mrb[0].mxu0
      %v1448 = vadd.f32 %v1335, %v1447
      %v1449 = vpop.f32.mrb[0].mxu0
      %v1450 = vpop.f32.mrb[0].mxu0
      %v1451 = vadd.f32 %v1335, %v1450
      %v1452 = vpop.f32.mrb[0].mxu0
      %1453 = vmatprep.mubr.bf16.mxu0 0
      %1454 = vmatmul.mubr.bf16.gmra.mrb[0].mxu0 %v1360
      %v1455 = vpop.f32.mrb[0].mxu0
      %v1456 = vadd.f32 %v1335, %v1455
      %v1457 = vpop.f32.mrb[0].mxu0
      %v1458 = vpop.f32.mrb[0].mxu0
      %v1459 = vadd.f32 %v1335, %v1458
      %v1460 = vpop.f32.mrb[0].mxu0
      %1461 = vmatprep.mubr.bf16.mxu0 0
      %1462 = vmatmul.mubr.bf16.gmra.mrb[0].mxu0 %v1363
      %v1463 = vpop.f32.mrb[0].mxu0
      %v1464 = vadd.f32 %v1335, %v1463
      %v1465 = vpop.f32.mrb[0].mxu0
      %v1466 = vpop.f32.mrb[0].mxu0
      %v1467 = vadd.f32 %v1335, %v1466
      %v1468 = vpop.f32.mrb[0].mxu0
      %1469 = vmatprep.mubr.bf16.mxu0 0
      %1470 = vmatmul.mubr.bf16.gmra.mrb[0].mxu0 %v1366
      %v1471 = vpop.f32.mrb[0].mxu0
      %v1472 = vadd.f32 %v1335, %v1471
      %v1473 = vpop.f32.mrb[0].mxu0
      %v1474 = vpop.f32.mrb[0].mxu0
      %v1475 = vadd.f32 %v1335, %v1474
      %v1476 = vpop.f32.mrb[0].mxu0
      %1477 = vmatprep.mubr.bf16.mxu0 0
      %1478 = vmatmul.mubr.bf16.gmra.mrb[0].mxu0 %v1369
      %v1479 = vpop.f32.mrb[0].mxu0
      %v1480 = vadd.f32 %v1335, %v1479
      %v1481 = vpop.f32.mrb[0].mxu0
      %v1482 = vpop.f32.mrb[0].mxu0
      %v1483 = vadd.f32 %v1335, %v1482
      %v1484 = vpop.f32.mrb[0].mxu0
      %1485 = vmatprep.mubr.bf16.mxu0 0
      %1486 = vmatmul.mubr.bf16.gmra.mrb[0].mxu0 %v1372
      %v1487 = vpop.f32.mrb[0].mxu0
      %v1488 = vadd.f32 %v1335, %v1487
      %v1489 = vpop.f32.mrb[0].mxu0
      %v1490 = vpop.f32.mrb[0].mxu0
      %v1491 = vadd.f32 %v1335, %v1490
      %v1492 = vpop.f32.mrb[0].mxu0
      %1493 = vmatprep.mubr.bf16.mxu0 0
      %1494 = vmatmul.mubr.bf16.gmra.mrb[0].mxu0 %v1375
      %v1495 = vpop.f32.mrb[0].mxu0
      %v1496 = vadd.f32 %v1335, %v1495
      %v1497 = vpop.f32.mrb[0].mxu0
      %v1498 = vpop.f32.mrb[0].mxu0
      %v1499 = vadd.f32 %v1335, %v1498
      %v1500 = vpop.f32.mrb[0].mxu0
      %1501 = vmatprep.mubr.bf16.mxu0 0
      %1502 = vmatmul.mubr.bf16.gmra.mrb[0].mxu0 %v1378
      %v1503 = vpop.f32.mrb[0].mxu0
      %v1504 = vadd.f32 %v1335, %v1503
      %v1505 = vpop.f32.mrb[0].mxu0
      %v1506 = vpop.f32.mrb[0].mxu0
      %v1507 = vadd.f32 %v1335, %v1506
      %v1508 = vpop.f32.mrb[0].mxu0
      %1509 = vmatprep.mubr.bf16.mxu0 0
      %1510 = vmatmul.mubr.bf16.gmra.mrb[0].mxu0 %v1381
      %v1511 = vpop.f32.mrb[0].mxu0
      %v1512 = vadd.f32 %v1335, %v1511
      %v1513 = vpop.f32.mrb[0].mxu0
      %v1514 = vpop.f32.mrb[0].mxu0
      %v1515 = vadd.f32 %v1335, %v1514
      %v1516 = vpop.f32.mrb[0].mxu0
      %1517 = vmatprep.mubr.bf16.mxu0 0
      %1518 = vmatmul.mubr.bf16.gmra.mrb[0].mxu0 %v1384
      %v1519 = vpop.f32.mrb[0].mxu0
      %v1520 = vadd.f32 %v1335, %v1519
      %v1521 = vpop.f32.mrb[0].mxu0
      %v1522 = vpop.f32.mrb[0].mxu0
      %v1523 = vadd.f32 %v1335, %v1522
      %v1524 = vpop.f32.mrb[0].mxu0
      %1525 = vmatprep.mubr.bf16.mxu0 0
      %1526 = vmatmul.mubr.bf16.gmra.mrb[0].mxu0 %v1387
      %v1527 = vpop.f32.mrb[0].mxu0
      %v1528 = vadd.f32 %v1335, %v1527
      %v1529 = vpop.f32.mrb[0].mxu0
      %v1530 = vpop.f32.mrb[0].mxu0
      %v1531 = vadd.f32 %v1335, %v1530
      %v1532 = vpop.f32.mrb[0].mxu0
      %1533 = vmatprep.mubr.bf16.mxu0 0
      %1534 = vmatmul.mubr.bf16.gmra.mrb[0].mxu0 %v1390
      %v1535 = vpop.f32.mrb[0].mxu0
      %v1536 = vadd.f32 %v1335, %v1535
      %v1537 = vpop.f32.mrb[0].mxu0
      %v1538 = vpop.f32.mrb[0].mxu0
      %v1539 = vadd.f32 %v1335, %v1538
      %v1540 = vpop.f32.mrb[0].mxu0
      %1541 = vmatprep.mubr.bf16.mxu0 0
      %1542 = vmatmul.mubr.bf16.gmra.mrb[0].mxu0 %v1393
      %v1543 = vpop.f32.mrb[0].mxu0
      %v1544 = vadd.f32 %v1335, %v1543
      %v1545 = vpop.f32.mrb[0].mxu0
      %v1546 = vpop.f32.mrb[0].mxu0
      %v1547 = vadd.f32 %v1335, %v1546
      %v1548 = vpop.f32.mrb[0].mxu0
      %1549 = vmatprep.mubr.bf16.mxu0 0
      %1550 = vmatmul.mubr.bf16.gmra.mrb[0].mxu0 %v1396
      %v1551 = vpop.f32.mrb[0].mxu0
      %v1552 = vadd.f32 %v1335, %v1551
      %v1553 = vpop.f32.mrb[0].mxu0
      %v1554 = vpop.f32.mrb[0].mxu0
      %v1555 = vadd.f32 %v1335, %v1554
      %v1556 = vpop.f32.mrb[0].mxu0
      %1557 = vmatprep.mubr.bf16.mxu0 0
      %1558 = vmatmul.mubr.bf16.gmra.mrb[0].mxu0 %v1399
      %v1559 = vpop.f32.mrb[0].mxu0
      %v1560 = vadd.f32 %v1335, %v1559
      %v1561 = vpop.f32.mrb[0].mxu0
      %v1562 = vpop.f32.mrb[0].mxu0
      %v1563 = vadd.f32 %v1335, %v1562
      %v1564 = vpop.f32.mrb[0].mxu0
      %1565 = vdwg.mxu0
      %v1566 = vmax.f32 %v1440, 0.0
      %v1567 = vmax.f32 %v1443, 0.0
      %v1568 = vmax.f32 %v1448, 0.0
      %v1569 = vmax.f32 %v1451, 0.0
      %v1570 = vmax.f32 %v1456, 0.0
      %v1571 = vmax.f32 %v1459, 0.0
      %v1572 = vmax.f32 %v1464, 0.0
      %v1573 = vmax.f32 %v1467, 0.0
      %v1574 = vmax.f32 %v1472, 0.0
      %v1575 = vmax.f32 %v1475, 0.0
      %v1576 = vmax.f32 %v1480, 0.0
      %v1577 = vmax.f32 %v1483, 0.0
      %v1578 = vmax.f32 %v1488, 0.0
      %v1579 = vmax.f32 %v1491, 0.0
      %v1580 = vmax.f32 %v1496, 0.0
      %v1581 = vmax.f32 %v1499, 0.0
      %v1582 = vmax.f32 %v1504, 0.0
      %v1583 = vmax.f32 %v1507, 0.0
      %v1584 = vmax.f32 %v1512, 0.0
      %v1585 = vmax.f32 %v1515, 0.0
      %v1586 = vmax.f32 %v1520, 0.0
      %v1587 = vmax.f32 %v1523, 0.0
      %v1588 = vmax.f32 %v1528, 0.0
      %v1589 = vmax.f32 %v1531, 0.0
      %v1590 = vmax.f32 %v1536, 0.0
      %v1591 = vmax.f32 %v1539, 0.0
      %v1592 = vmax.f32 %v1544, 0.0
      %v1593 = vmax.f32 %v1547, 0.0
      %v1594 = vmax.f32 %v1552, 0.0
      %v1595 = vmax.f32 %v1555, 0.0
      %v1596 = vmax.f32 %v1560, 0.0
      %v1597 = vmax.f32 %v1563, 0.0
      %vm1598 = vcmask 64512
      %1599 = vst.msk [vmem:[%s204] sm:$0xff] %vm1598, %v1566
      %1600 = vst.msk [vmem:[%s204 + $0x8] sm:$0xff] %vm1598, %v1567
      %1601 = vst.msk [vmem:[%s204 + $0x10] sm:$0xff] %vm1598, %v1568
      %1602 = vst.msk [vmem:[%s204 + $0x18] sm:$0xff] %vm1598, %v1569
      %1603 = vst.msk [vmem:[%s204 + $0x20] sm:$0xff] %vm1598, %v1570
      %1604 = vst.msk [vmem:[%s204 + $0x28] sm:$0xff] %vm1598, %v1571
      %1605 = vst.msk [vmem:[%s204 + $0x30] sm:$0xff] %vm1598, %v1572
      %1606 = vst.msk [vmem:[%s204 + $0x38] sm:$0xff] %vm1598, %v1573
      %1607 = vst.msk [vmem:[%s204 + $0x40] sm:$0xff] %vm1598, %v1574
      %1608 = vst.msk [vmem:[%s204 + $0x48] sm:$0xff] %vm1598, %v1575
      %1609 = vst.msk [vmem:[%s204 + $0x50] sm:$0xff] %vm1598, %v1576
      %1610 = vst.msk [vmem:[%s204 + $0x58] sm:$0xff] %vm1598, %v1577
      %1611 = vst.msk [vmem:[%s204 + $0x60] sm:$0xff] %vm1598, %v1578
      %1612 = vst.msk [vmem:[%s204 + $0x68] sm:$0xff] %vm1598, %v1579
      %1613 = vst.msk [vmem:[%s204 + $0x70] sm:$0xff] %vm1598, %v1580
      %1614 = vst.msk [vmem:[%s204 + $0x78] sm:$0xff] %vm1598, %v1581
      %1615 = vst.msk [vmem:[%s204 + $0x80] sm:$0xff] %vm1598, %v1582
      %1616 = vst.msk [vmem:[%s204 + $0x88] sm:$0xff] %vm1598, %v1583
      %1617 = vst.msk [vmem:[%s204 + $0x90] sm:$0xff] %vm1598, %v1584
      %1618 = vst.msk [vmem:[%s204 + $0x98] sm:$0xff] %vm1598, %v1585
      %1619 = vst.msk [vmem:[%s204 + $0xa0] sm:$0xff] %vm1598, %v1586
      %1620 = vst.msk [vmem:[%s204 + $0xa8] sm:$0xff] %vm1598, %v1587
      %1621 = vst.msk [vmem:[%s204 + $0xb0] sm:$0xff] %vm1598, %v1588
      %1622 = vst.msk [vmem:[%s204 + $0xb8] sm:$0xff] %vm1598, %v1589
      %1623 = vst.msk [vmem:[%s204 + $0xc0] sm:$0xff] %vm1598, %v1590
      %1624 = vst.msk [vmem:[%s204 + $0xc8] sm:$0xff] %vm1598, %v1591
      %1625 = vst.msk [vmem:[%s204 + $0xd0] sm:$0xff] %vm1598, %v1592
      %1626 = vst.msk [vmem:[%s204 + $0xd8] sm:$0xff] %vm1598, %v1593
      %1627 = vst.msk [vmem:[%s204 + $0xe0] sm:$0xff] %vm1598, %v1594
      %1628 = vst.msk [vmem:[%s204 + $0xe8] sm:$0xff] %vm1598, %v1595
      %1629 = vst.msk [vmem:[%s204 + $0xf0] sm:$0xff] %vm1598, %v1596
      %1630 = vst.msk [vmem:[%s204 + $0xf8] sm:$0xff] %vm1598, %v1597
      %v1631 = vsel %vm1598, %v1566, 0.0
      %v1632 = vsel %vm1598, %v1567, 0.0
      %v1633 = vadd.f32 %v1631, %v1632
      %v1634 = vsel %vm1598, %v1568, 0.0
      %v1635 = vadd.f32 %v1633, %v1634
      %v1636 = vsel %vm1598, %v1569, 0.0
      %v1637 = vadd.f32 %v1635, %v1636
      %v1638 = vsel %vm1598, %v1570, 0.0
      %v1639 = vadd.f32 %v1637, %v1638
      %v1640 = vsel %vm1598, %v1571, 0.0
      %v1641 = vadd.f32 %v1639, %v1640
      %v1642 = vsel %vm1598, %v1572, 0.0
      %v1643 = vadd.f32 %v1641, %v1642
      %v1644 = vsel %vm1598, %v1573, 0.0
      %v1645 = vadd.f32 %v1643, %v1644
      %v1646 = vsel %vm1598, %v1574, 0.0
      %v1647 = vadd.f32 %v1645, %v1646
      %v1648 = vsel %vm1598, %v1575, 0.0
      %v1649 = vadd.f32 %v1647, %v1648
      %v1650 = vsel %vm1598, %v1576, 0.0
      %v1651 = vadd.f32 %v1649, %v1650
      %v1652 = vsel %vm1598, %v1577, 0.0
      %v1653 = vadd.f32 %v1651, %v1652
      %v1654 = vsel %vm1598, %v1578, 0.0
      %v1655 = vadd.f32 %v1653, %v1654
      %v1656 = vsel %vm1598, %v1579, 0.0
      %v1657 = vadd.f32 %v1655, %v1656
      %v1658 = vsel %vm1598, %v1580, 0.0
      %v1659 = vadd.f32 %v1657, %v1658
      %v1660 = vsel %vm1598, %v1581, 0.0
      %v1661 = vadd.f32 %v1659, %v1660
      %v1662 = vsel %vm1598, %v1582, 0.0
      %v1663 = vadd.f32 %v1661, %v1662
      %v1664 = vsel %vm1598, %v1583, 0.0
      %v1665 = vadd.f32 %v1663, %v1664
      %v1666 = vsel %vm1598, %v1584, 0.0
      %v1667 = vadd.f32 %v1665, %v1666
      %v1668 = vsel %vm1598, %v1585, 0.0
      %v1669 = vadd.f32 %v1667, %v1668
      %v1670 = vsel %vm1598, %v1586, 0.0
      %v1671 = vadd.f32 %v1669, %v1670
      %v1672 = vsel %vm1598, %v1587, 0.0
      %v1673 = vadd.f32 %v1671, %v1672
      %v1674 = vsel %vm1598, %v1588, 0.0
      %v1675 = vadd.f32 %v1673, %v1674
      %v1676 = vsel %vm1598, %v1589, 0.0
      %v1677 = vadd.f32 %v1675, %v1676
      %v1678 = vsel %vm1598, %v1590, 0.0
      %v1679 = vadd.f32 %v1677, %v1678
      %v1680 = vsel %vm1598, %v1591, 0.0
      %v1681 = vadd.f32 %v1679, %v1680
      %v1682 = vsel %vm1598, %v1592, 0.0
      %v1683 = vadd.f32 %v1681, %v1682
      %v1684 = vsel %vm1598, %v1593, 0.0
      %v1685 = vadd.f32 %v1683, %v1684
      %v1686 = vsel %vm1598, %v1594, 0.0
      %v1687 = vadd.f32 %v1685, %v1686
      %v1688 = vsel %vm1598, %v1595, 0.0
      %v1689 = vadd.f32 %v1687, %v1688
      %v1690 = vsel %vm1598, %v1596, 0.0
      %v1691 = vadd.f32 %v1689, %v1690
      %v1692 = vsel %vm1598, %v1597, 0.0
      %v1693 = vadd.f32 %v1691, %v1692
      %v1694 = vrot.slane %v1693, 4
      %v1695 = vadd.f32 %v1693, %v1694
      %v1696 = vrot.slane %v1695, 2
      %v1697 = vadd.f32 %v1695, %v1696
      %v1698 = vrot.slane %v1697, 1
      %v1699 = vadd.f32 %v1697, %v1698
      %vm1700 = vcmask 57344
      %1701 = vst.msk [vmem:[%s208] sm:$0x1] %vm1700, %v1699
      %v1702 = vmul.f32 %v1566, %v1566
      %v1703 = vmul.f32 %v1567, %v1567
      %v1704 = vmul.f32 %v1568, %v1568
      %v1705 = vmul.f32 %v1569, %v1569
      %v1706 = vmul.f32 %v1570, %v1570
      %v1707 = vmul.f32 %v1571, %v1571
      %v1708 = vmul.f32 %v1572, %v1572
      %v1709 = vmul.f32 %v1573, %v1573
      %v1710 = vmul.f32 %v1574, %v1574
      %v1711 = vmul.f32 %v1575, %v1575
      %v1712 = vmul.f32 %v1576, %v1576
      %v1713 = vmul.f32 %v1577, %v1577
      %v1714 = vmul.f32 %v1578, %v1578
      %v1715 = vmul.f32 %v1579, %v1579
      %v1716 = vmul.f32 %v1580, %v1580
      %v1717 = vmul.f32 %v1581, %v1581
      %v1718 = vmul.f32 %v1582, %v1582
      %v1719 = vmul.f32 %v1583, %v1583
      %v1720 = vmul.f32 %v1584, %v1584
      %v1721 = vmul.f32 %v1585, %v1585
      %v1722 = vmul.f32 %v1586, %v1586
      %v1723 = vmul.f32 %v1587, %v1587
      %v1724 = vmul.f32 %v1588, %v1588
      %v1725 = vmul.f32 %v1589, %v1589
      %v1726 = vmul.f32 %v1590, %v1590
      %v1727 = vmul.f32 %v1591, %v1591
      %v1728 = vmul.f32 %v1592, %v1592
      %v1729 = vmul.f32 %v1593, %v1593
      %v1730 = vmul.f32 %v1594, %v1594
      %v1731 = vmul.f32 %v1595, %v1595
      %v1732 = vmul.f32 %v1596, %v1596
      %v1733 = vmul.f32 %v1597, %v1597
      %v1734 = vsel %vm1598, %v1702, 0.0
      %v1735 = vsel %vm1598, %v1703, 0.0
      %v1736 = vadd.f32 %v1734, %v1735
      %v1737 = vsel %vm1598, %v1704, 0.0
      %v1738 = vadd.f32 %v1736, %v1737
      %v1739 = vsel %vm1598, %v1705, 0.0
      %v1740 = vadd.f32 %v1738, %v1739
      %v1741 = vsel %vm1598, %v1706, 0.0
      %v1742 = vadd.f32 %v1740, %v1741
      %v1743 = vsel %vm1598, %v1707, 0.0
      %v1744 = vadd.f32 %v1742, %v1743
      %v1745 = vsel %vm1598, %v1708, 0.0
      %v1746 = vadd.f32 %v1744, %v1745
      %v1747 = vsel %vm1598, %v1709, 0.0
      %v1748 = vadd.f32 %v1746, %v1747
      %v1749 = vsel %vm1598, %v1710, 0.0
      %v1750 = vadd.f32 %v1748, %v1749
      %v1751 = vsel %vm1598, %v1711, 0.0
      %v1752 = vadd.f32 %v1750, %v1751
      %v1753 = vsel %vm1598, %v1712, 0.0
      %v1754 = vadd.f32 %v1752, %v1753
      %v1755 = vsel %vm1598, %v1713, 0.0
      %v1756 = vadd.f32 %v1754, %v1755
      %v1757 = vsel %vm1598, %v1714, 0.0
      %v1758 = vadd.f32 %v1756, %v1757
      %v1759 = vsel %vm1598, %v1715, 0.0
      %v1760 = vadd.f32 %v1758, %v1759
      %v1761 = vsel %vm1598, %v1716, 0.0
      %v1762 = vadd.f32 %v1760, %v1761
      %v1763 = vsel %vm1598, %v1717, 0.0
      %v1764 = vadd.f32 %v1762, %v1763
      %v1765 = vsel %vm1598, %v1718, 0.0
      %v1766 = vadd.f32 %v1764, %v1765
      %v1767 = vsel %vm1598, %v1719, 0.0
      %v1768 = vadd.f32 %v1766, %v1767
      %v1769 = vsel %vm1598, %v1720, 0.0
      %v1770 = vadd.f32 %v1768, %v1769
      %v1771 = vsel %vm1598, %v1721, 0.0
      %v1772 = vadd.f32 %v1770, %v1771
      %v1773 = vsel %vm1598, %v1722, 0.0
      %v1774 = vadd.f32 %v1772, %v1773
      %v1775 = vsel %vm1598, %v1723, 0.0
      %v1776 = vadd.f32 %v1774, %v1775
      %v1777 = vsel %vm1598, %v1724, 0.0
      %v1778 = vadd.f32 %v1776, %v1777
      %v1779 = vsel %vm1598, %v1725, 0.0
      %v1780 = vadd.f32 %v1778, %v1779
      %v1781 = vsel %vm1598, %v1726, 0.0
      %v1782 = vadd.f32 %v1780, %v1781
      %v1783 = vsel %vm1598, %v1727, 0.0
      %v1784 = vadd.f32 %v1782, %v1783
      %v1785 = vsel %vm1598, %v1728, 0.0
      %v1786 = vadd.f32 %v1784, %v1785
      %v1787 = vsel %vm1598, %v1729, 0.0
      %v1788 = vadd.f32 %v1786, %v1787
      %v1789 = vsel %vm1598, %v1730, 0.0
      %v1790 = vadd.f32 %v1788, %v1789
      %v1791 = vsel %vm1598, %v1731, 0.0
      %v1792 = vadd.f32 %v1790, %v1791
      %v1793 = vsel %vm1598, %v1732, 0.0
      %v1794 = vadd.f32 %v1792, %v1793
      %v1795 = vsel %vm1598, %v1733, 0.0
      %v1796 = vadd.f32 %v1794, %v1795
      %v1797 = vrot.slane %v1796, 4
      %v1798 = vadd.f32 %v1796, %v1797
      %v1799 = vrot.slane %v1798, 2
      %v1800 = vadd.f32 %v1798, %v1799
      %v1801 = vrot.slane %v1800, 1
      %v1802 = vadd.f32 %v1800, %v1801
      %1803 = vst.msk [vmem:[%s208 + $0x1] sm:$0x1] %vm1700, %v1802
      %p1804 = scmp.lt.s32.totalorder %s16, 1
      %s1805 = scalar_select %p1804, %s16, 1
      %s1806 = smul.addr %s1805, 32
      %s1807 = smul.addr %s1806, 8
      %s1808 = scalar_lea.vmem %s3, %s1807
      %p1809 = scmp.lt.s32.totalorder %s16, 1
      %s1810 = scalar_select %p1809, %s16, 1
      %s1811 = smul.addr %s1810, 2
      %s1812 = scalar_lea.vmem %s4, %s1811
      // Predicated region
      $region33: #{cnn_block_forward.2} parent=31 // pred_check
        %p1813 = pneg %p102
      $region34: #{cnn_block_forward.2} parent=31 // pred_check_branch
        %1815 = sbr.rel (%p1813) target = $region36
      $region35: #{cnn_block_forward.2} parent=31 // pred_region
        _
      $region36: #{cnn_block_forward.2} parent=31 // pred_fallthru
        _
      // Predicated region
      $region37: #{cnn_block_forward.2} parent=31 // pred_check
        %p1816 = pneg %p128
      $region38: #{cnn_block_forward.2} parent=31 // pred_check_branch
        %1818 = sbr.rel (%p1816) target = $region40
      $region39: #{cnn_block_forward.2} parent=31 // pred_region
        _
      $region40: #{cnn_block_forward.2} parent=31 // pred_fallthru
        _
    $region32: #{cnn_block_forward.2} parent=5 // pred_fallthru
      _
    %p1819 = scmp.le.s32.totalorder 2, %s11
    // Predicated region
    $region41: #{cnn_block_forward.2} parent=5 // pred_check
      %p1820 = pneg %p1819
    $region42: #{cnn_block_forward.2} parent=5 // pred_check_branch
      %1822 = sbr.rel (%p1820) target = $region44
    $region43: #{cnn_block_forward.2} parent=5 // pred_region
      %s1823 = ssub.s32 %s11, 2
      // Predicated region
      $region45: #{cnn_block_forward.2} parent=43 // pred_check
        %p1824 = pneg %p108
      $region46: #{cnn_block_forward.2} parent=43 // pred_check_branch
        %1826 = sbr.rel (%p1824) target = $region48
      $region47: #{cnn_block_forward.2} parent=43 // pred_region
        %p1827 = scmp.lt.s32.totalorder %s17, 1
        %s1828 = scalar_select %p1827, %s17, 1
        %s1829 = smul.addr %s1828, 32
        %s1830 = smul.addr %s1829, 8
        %s1831 = scalar_lea.vmem %s3, %s1830
      $region48: #{cnn_block_forward.2} parent=43 // pred_fallthru
        _
      // Predicated region
      $region49: #{cnn_block_forward.2} parent=43 // pred_check
        %p1832 = pneg %p134
      $region50: #{cnn_block_forward.2} parent=43 // pred_check_branch
        %1834 = sbr.rel (%p1832) target = $region52
      $region51: #{cnn_block_forward.2} parent=43 // pred_region
        %p1835 = scmp.lt.s32.totalorder %s17, 1
        %s1836 = scalar_select %p1835, %s17, 1
        %s1837 = smul.addr %s1836, 2
        %s1838 = scalar_lea.vmem %s4, %s1837
      $region52: #{cnn_block_forward.2} parent=43 // pred_fallthru
        _
    $region44: #{cnn_block_forward.2} parent=5 // pred_fallthru
      _
  $region6: #{cnn_block_forward.2} parent=0 // loop_footer
    %s15 = sadd.s32 1, %s11
  $region7: #{cnn_block_forward.2} parent=0 // loop_footer_branch
    %10 = sbr.rel target = $region3
  $region8: #{cnn_block_forward.2} parent=0 // loop_exit
    _

</llo_original>
